<compile_context>
chip_gen: v7x
topology: tpu7x:2x2x1
jax: 0.10.0
libtpu: 0.0.40
codegen_flags: <defaults>
</compile_context>

<pallas_src>
import jax
import jax.numpy as jnp
from jax.experimental import pallas as pl
from jax.experimental.pallas import tpu as pltpu


# ----------------------------------------------------------------------------
# Fused decoder-step kernel (grid-less, everything resident in VMEM)
# ----------------------------------------------------------------------------
def _decoder_step_kernel(
        emb_ref,        # (B, E)           embedded target token
        state_ref,      # (2, L, B, H)     [hidden; cell] (aliased in place)
        eo_ref,         # (B, S, H)        encoder outputs (batch-major)
        attn_wt_ref,    # (3H, H)          attention weight, pre-transposed
        w0_ref,         # (E+2H, 4H)       layer-0 fused [W_ih_emb; W_ih_ctx; W_hh]
        wr_ref,         # (max(L-1,1), 2H, 4H)  layers>=1 fused [W_ih_presum; W_hh]
        bv_ref,         # (L+3, W)         rows: attn_b | v0 | b_l0..b_l(L-1) | out_b
        ow_ref,         # (H, O)           output projection weight, pre-transposed
        logp_ref,       # out: (B, O)      log-softmax over target vocab
        state_out_ref,  # out: (2, L, B, H)  new [hidden; cell] (aliases state_ref)
):
    _, L, B, H = state_ref.shape
    S = eo_ref.shape[1]
    O = ow_ref.shape[1]

    def lstm_cell(gates, c_prev):
        # PyTorch gate order: i, f, g, o
        i_g = jax.nn.sigmoid(gates[:, 0 * H:1 * H])
        f_g = jax.nn.sigmoid(gates[:, 1 * H:2 * H])
        g_g = jnp.tanh(gates[:, 2 * H:3 * H])
        o_g = jax.nn.sigmoid(gates[:, 3 * H:4 * H])
        c_new = f_g * c_prev + i_g * g_g
        h_new = o_g * jnp.tanh(c_new)
        return h_new, c_new

    h0 = state_ref[0, 0]                       # (B, H)
    c0 = state_ref[1, 0]                       # (B, H)
    eo = eo_ref[...]                           # (B, S, H)

    ab = bv_ref[0:1, 0:H]                      # attention bias      (1, H)
    v0 = bv_ref[1:2, 0:H]                      # attention v[0]      (1, H)

    # ---- layer 0 attention over encoder outputs ----------------------------
    # Hidden/cell projection is source-position independent: one fused MXU
    # push over the lane-concatenated (h0 | c0), broadcast over S afterwards.
    hc = jnp.concatenate([h0, c0], axis=-1)                          # (B, 2H)
    proj_state = jnp.dot(hc, attn_wt_ref[0:2 * H, :],
                         preferred_element_type=jnp.float32) + ab    # (B, H)

    eo2d = eo.reshape(B * S, H)
    proj_eo = jnp.dot(eo2d, attn_wt_ref[2 * H:3 * H, :],
                      preferred_element_type=jnp.float32).reshape(B, S, H)
    energy = jnp.tanh(proj_eo + proj_state[:, None, :])              # (B, S, H)

    # TODO(synk): at production S express logits/weighted as MXU matmuls
    # ((B*S,H)@(H,1) and batched attn@eo); negligible at S=8.
    logits = jnp.sum(energy * v0, axis=-1, keepdims=True)            # (B, S, 1)
    m = jnp.max(logits, axis=1, keepdims=True)
    p = jnp.exp(logits - m)
    attn = p / jnp.sum(p, axis=1, keepdims=True)                     # (B, S, 1)
    weighted = jnp.sum(attn * eo, axis=1)                            # (B, H)

    # ---- layer 0 LSTM cell: one fused MXU push ------------------------------
    x0 = jnp.concatenate([emb_ref[...], weighted, h0], axis=-1)      # (B, E+2H)
    gates = (jnp.dot(x0, w0_ref[...], preferred_element_type=jnp.float32)
             + bv_ref[2:3, 0:4 * H])
    h_new, c_new = lstm_cell(gates, c0)
    state_out_ref[0, 0] = h_new
    state_out_ref[1, 0] = c_new
    output = h_new

    # ---- layers 1 .. L-1 -----------------------------------------------------
    # attn_input is the previous layer's single-step output (src_len == 1), so
    # softmax over one position is exactly 1 and the context equals `output`.
    # With eval-mode dropout, concat(output, output) @ W_ih^T collapses to
    # output @ (W_ih[:,:H] + W_ih[:,H:])^T, which is pre-summed and stacked on
    # top of W_hh^T in wr_ref -> one MXU push per layer.
    # TODO(synk): F.dropout between layers omitted (eval-mode identity).
    for i in range(1, L):
        h_i = state_ref[0, i]
        c_i = state_ref[1, i]
        xi = jnp.concatenate([output, h_i], axis=-1)                 # (B, 2H)
        gates = (jnp.dot(xi, wr_ref[i - 1],
                         preferred_element_type=jnp.float32)
                 + bv_ref[2 + i:3 + i, 0:4 * H])
        h_new, c_new = lstm_cell(gates, c_i)
        state_out_ref[0, i] = h_new
        state_out_ref[1, i] = c_new
        output = h_new

    # ---- output projection + log-softmax (lane-dense O) ----------------------
    out_logits = (jnp.dot(output, ow_ref[...],
                          preferred_element_type=jnp.float32)
                  + bv_ref[L + 2:L + 3, 0:O])                        # (B, O)
    mo = jnp.max(out_logits, axis=-1, keepdims=True)
    sh = out_logits - mo
    # TODO(synk): pl.reciprocal(approx=True) would move the divide to the EUP
    # but perturbs the 1e-4 parity check.
    logp_ref[...] = sh - jnp.log(jnp.sum(jnp.exp(sh), axis=-1, keepdims=True))


# ----------------------------------------------------------------------------
# One-time weight preparation (hoisted out of the per-token path)
# ----------------------------------------------------------------------------
def prepare_decoder_params(params):
    emb_table, attn_w, attn_b, attn_v, lstm_params, out_w, out_b = params
    L = len(lstm_params)
    H = attn_w.shape[0]
    E = emb_table.shape[1]
    O = out_w.shape[0]

    # Attention Linear(3H -> H): pre-transpose to lane-dense (3H, H); rows are
    # ordered (hidden | cell | enc_out) to match the reference column split.
    attn_wt = attn_w.T

    # Layer-0 LSTM: fuse [W_ih_emb; W_ih_weighted; W_hh] along K.
    w_ih0, w_hh0, _, _ = lstm_params[0]
    w0 = jnp.concatenate([w_ih0[:, :E].T, w_ih0[:, E:].T, w_hh0.T], axis=0)

    # Layers >= 1: pre-sum the two identical-input halves of W_ih and stack
    # over W_hh along K -> one (2H, 4H) weight per layer.
    if L > 1:
        wr = jnp.stack(
            [jnp.concatenate([(w_ih[:, :H] + w_ih[:, H:]).T, w_hh.T], axis=0)
             for (w_ih, w_hh, _, _) in lstm_params[1:]], axis=0)
    else:
        wr = jnp.zeros((1, 2 * H, 4 * H), jnp.float32)   # unused placeholder

    # Bias / vector pack: rows = [attn_b | v[0] | (b_ih+b_hh) per layer | out_b]
    W = max(H, 4 * H, O)

    def pad_row(v):
        v = v.reshape(1, -1)
        return jnp.pad(v, ((0, 0), (0, W - v.shape[1])))

    rows = [pad_row(attn_b), pad_row(attn_v[0])]
    rows += [pad_row(b_ih + b_hh) for (_, _, b_ih, b_hh) in lstm_params]
    rows += [pad_row(out_b)]
    bv = jnp.concatenate(rows, axis=0)                   # (L+3, W)

    ow = out_w.T                                         # (H, O)

    return dict(emb_table=emb_table, attn_wt=attn_wt, w0=w0, wr=wr,
                bv=bv, ow=ow)


def prepare_encoder_outputs(encoder_outputs):
    # (S, B, H) -> (B, S, H), done once per source sequence.
    return jnp.transpose(encoder_outputs, (1, 0, 2))


# ----------------------------------------------------------------------------
# Per-token decoder step: embedding gather + single fused pallas_call
# ----------------------------------------------------------------------------
def decoder_step(src, state, eo_bsh, prep):
    """One decode step.

    src: (B,) int32; state: (2, L, B, H) packed [hidden; cell];
    eo_bsh: (B, S, H).  Returns (log_probs (B, O), new_state (2, L, B, H)).
    """
    B = state.shape[2]
    O = prep['ow'].shape[1]
    embedded = prep['emb_table'][src]          # (B, E) gather glue (outside kernel)

    vmem = pl.BlockSpec(memory_space=pltpu.MemorySpace.VMEM)
    return pl.pallas_call(
        _decoder_step_kernel,
        out_shape=(jax.ShapeDtypeStruct((B, O), jnp.float32),
                   jax.ShapeDtypeStruct(state.shape, state.dtype)),
        in_specs=[vmem] * 8,
        out_specs=(vmem, vmem),
        input_output_aliases={1: 1},           # state updated in place (P8)
    )(embedded, state, eo_bsh,
      prep['attn_wt'], prep['w0'], prep['wr'], prep['bv'], prep['ow'])


# ----------------------------------------------------------------------------
# Pure-JAX reference (literal translation of the PyTorch forward)
# ----------------------------------------------------------------------------
def _attention_ref(hidden_i, cell_i, attn_input, attn_w, attn_b, v_i):
    src_len, batch, _ = attn_input.shape
    h_rep = jnp.broadcast_to(hidden_i[:, None, :],
                             (batch, src_len, hidden_i.shape[1]))
    c_rep = jnp.broadcast_to(cell_i[:, None, :],
                             (batch, src_len, cell_i.shape[1]))
    ai = jnp.transpose(attn_input, (1, 0, 2))                   # (B, S, H)
    states = jnp.concatenate([h_rep, c_rep, ai], axis=2)        # (B, S, 3H)
    energy = jnp.tanh(states @ attn_w.T + attn_b)               # (B, S, H)
    energy = jnp.transpose(energy, (0, 2, 1))                   # (B, H, S)
    v = jnp.broadcast_to(v_i[None, None, :], (batch, 1, v_i.shape[0]))
    attention = jnp.matmul(v, energy)[:, 0, :]                  # (B, S)
    return jax.nn.softmax(attention, axis=1)


def decoder_forward_ref(src, hidden, cell, encoder_outputs, params):
    emb_table, attn_w, attn_b, attn_v, lstm_params, out_w, out_b = params
    n_layers = len(lstm_params)
    H = hidden.shape[2]
    embedded = emb_table[src][None]                             # (1, B, E)
    output = None
    hs, cs = [], []
    for i in range(n_layers):
        if i == 0:
            rnn_input = embedded
            attn_input = encoder_outputs
        else:
            rnn_input = output          # F.dropout treated as identity (eval)
            attn_input = output
        a = _attention_ref(hidden[i], cell[i], attn_input,
                           attn_w, attn_b, attn_v[i])           # (B, S')
        ai = jnp.transpose(attn_input, (1, 0, 2))               # (B, S', H)
        weighted = jnp.matmul(a[:, None, :], ai)                # (B, 1, H)
        weighted = jnp.transpose(weighted, (1, 0, 2))           # (1, B, H)
        rnn_in = jnp.concatenate([rnn_input, weighted], axis=2)[0]
        w_ih, w_hh, b_ih, b_hh = lstm_params[i]
        gates = rnn_in @ w_ih.T + hidden[i] @ w_hh.T + b_ih + b_hh
        i_g = jax.nn.sigmoid(gates[:, 0 * H:1 * H])
        f_g = jax.nn.sigmoid(gates[:, 1 * H:2 * H])
        g_g = jnp.tanh(gates[:, 2 * H:3 * H])
        o_g = jax.nn.sigmoid(gates[:, 3 * H:4 * H])
        c_new = f_g * cell[i] + i_g * g_g
        h_new = o_g * jnp.tanh(c_new)
        output = h_new[None]
        hs.append(h_new)
        cs.append(c_new)
    logits = output[0] @ out_w.T + out_b
    return (jax.nn.log_softmax(logits, axis=1),
            jnp.stack(hs, axis=0), jnp.stack(cs, axis=0))


# ----------------------------------------------------------------------------
if __name__ == "__main__":
    VOCAB_SRC = 50
    HID_DIM = 32            # == pretrained embedding dim (per the module)
    EMB_DIM = HID_DIM
    N_LAYERS = 3
    SEQ_LEN = 8             # encoder source length
    BATCH = 8               # raised per perf review (fills sublanes / MXU M)
    OUTPUT_DIM = 128        # target vocab (lane-dense output head)

    key = jax.random.PRNGKey(0)
    keys = jax.random.split(key, 32)
    kit = iter(keys)

    emb_table = jax.random.normal(next(kit), (VOCAB_SRC, EMB_DIM), jnp.float32)

    s_attn = 1.0 / jnp.sqrt(jnp.float32(3 * HID_DIM))
    attn_w = jax.random.uniform(next(kit), (HID_DIM, 3 * HID_DIM), jnp.float32,
                                -s_attn, s_attn)
    attn_b = jax.random.uniform(next(kit), (HID_DIM,), jnp.float32,
                                -s_attn, s_attn)
    attn_v = jax.random.uniform(next(kit), (N_LAYERS, HID_DIM), jnp.float32,
                                0.0, 1.0)

    scale = 1.0 / jnp.sqrt(jnp.float32(HID_DIM))
    lstm_params = []
    for l in range(N_LAYERS):
        in_dim = (EMB_DIM if l == 0 else HID_DIM) + HID_DIM
        w_ih = jax.random.uniform(next(kit), (4 * HID_DIM, in_dim), jnp.float32,
                                  -scale, scale)
        w_hh = jax.random.uniform(next(kit), (4 * HID_DIM, HID_DIM), jnp.float32,
                                  -scale, scale)
        b_ih = jax.random.uniform(next(kit), (4 * HID_DIM,), jnp.float32,
                                  -scale, scale)
        b_hh = jax.random.uniform(next(kit), (4 * HID_DIM,), jnp.float32,
                                  -scale, scale)
        lstm_params.append((w_ih, w_hh, b_ih, b_hh))

    out_w = jax.random.uniform(next(kit), (OUTPUT_DIM, HID_DIM), jnp.float32,
                               -scale, scale)
    out_b = jax.random.uniform(next(kit), (OUTPUT_DIM,), jnp.float32,
                               -scale, scale)

    params = (emb_table, attn_w, attn_b, attn_v, lstm_params, out_w, out_b)

    src = jax.random.randint(next(kit), (BATCH,), 0, VOCAB_SRC, jnp.int32)
    hidden = jax.random.normal(next(kit), (N_LAYERS, BATCH, HID_DIM), jnp.float32)
    cell = jax.random.normal(next(kit), (N_LAYERS, BATCH, HID_DIM), jnp.float32)
    encoder_outputs = jax.random.normal(next(kit), (SEQ_LEN, BATCH, HID_DIM),
                                        jnp.float32)

    # One-time preparation (hoisted out of the per-token path).
    prep = prepare_decoder_params(params)
    eo_bsh = prepare_encoder_outputs(encoder_outputs)
    state = jnp.stack([hidden, cell], axis=0)        # (2, L, B, H)

    log_probs, state_new = decoder_step(src, state, eo_bsh, prep)
    jax.block_until_ready((log_probs, state_new))
    hidden_out, cell_out = state_new[0], state_new[1]

    # Correctness check against a literal pure-JAX reference.
    lp_r, h_r, c_r = decoder_forward_ref(src, hidden, cell, encoder_outputs,
                                         params)
    assert log_probs.shape == (BATCH, OUTPUT_DIM)
    assert hidden_out.shape == (N_LAYERS, BATCH, HID_DIM)
    assert cell_out.shape == (N_LAYERS, BATCH, HID_DIM)
    assert jnp.allclose(log_probs, lp_r, atol=1e-4, rtol=1e-4)
    assert jnp.allclose(hidden_out, h_r, atol=1e-4, rtol=1e-4)
    assert jnp.allclose(cell_out, c_r, atol=1e-4, rtol=1e-4)

    print("KERNEL_OK")
</pallas_src>

<mosaic_0001>
module attributes {stable_mosaic.version = 11 : i64} {
  func.func @_decoder_step_kernel(%arg0: memref<8x32xf32, #tpu.memory_space<vmem>>, %arg1: memref<2x3x8x32xf32, #tpu.memory_space<vmem>>, %arg2: memref<8x8x32xf32, #tpu.memory_space<vmem>>, %arg3: memref<96x32xf32, #tpu.memory_space<vmem>>, %arg4: memref<96x128xf32, #tpu.memory_space<vmem>>, %arg5: memref<2x64x128xf32, #tpu.memory_space<vmem>>, %arg6: memref<6x128xf32, #tpu.memory_space<vmem>>, %arg7: memref<32x128xf32, #tpu.memory_space<vmem>>, %arg8: memref<8x128xf32, #tpu.memory_space<vmem>>, %arg9: memref<2x3x8x32xf32, #tpu.memory_space<vmem>>) attributes {dimension_semantics = [], scalar_prefetch = 0 : i64, scratch_operands = 0 : i64, tpu.core_type = #tpu.core_type<tc>} {
    %c0 = arith.constant 0 : index
    %c0_0 = arith.constant 0 : index
    %c0_1 = arith.constant 0 : index
    %c0_2 = arith.constant 0 : index
    %0 = vector.load %arg1[%c0, %c0_0, %c0_1, %c0_2] : memref<2x3x8x32xf32, #tpu.memory_space<vmem>>, vector<1x1x8x32xf32>
    %1 = vector.shape_cast %0 : vector<1x1x8x32xf32> to vector<8x32xf32>
    %c1 = arith.constant 1 : index
    %c0_3 = arith.constant 0 : index
    %c0_4 = arith.constant 0 : index
    %c0_5 = arith.constant 0 : index
    %2 = vector.load %arg1[%c1, %c0_3, %c0_4, %c0_5] : memref<2x3x8x32xf32, #tpu.memory_space<vmem>>, vector<1x1x8x32xf32>
    %3 = vector.shape_cast %2 : vector<1x1x8x32xf32> to vector<8x32xf32>
    %c0_6 = arith.constant 0 : index
    %c0_7 = arith.constant 0 : index
    %c0_8 = arith.constant 0 : index
    %4 = vector.load %arg2[%c0_6, %c0_7, %c0_8] : memref<8x8x32xf32, #tpu.memory_space<vmem>>, vector<8x8x32xf32>
    %c0_9 = arith.constant 0 : index
    %c0_10 = arith.constant 0 : index
    %5 = vector.load %arg6[%c0_9, %c0_10] : memref<6x128xf32, #tpu.memory_space<vmem>>, vector<1x32xf32>
    %c1_11 = arith.constant 1 : index
    %c0_12 = arith.constant 0 : index
    %6 = vector.load %arg6[%c1_11, %c0_12] : memref<6x128xf32, #tpu.memory_space<vmem>>, vector<1x32xf32>
    %7 = tpu.concatenate %1, %3 in 1 : vector<8x32xf32>, vector<8x32xf32> -> vector<8x64xf32>
    %c0_13 = arith.constant 0 : index
    %c0_14 = arith.constant 0 : index
    %8 = vector.load %arg3[%c0_13, %c0_14] : memref<96x32xf32, #tpu.memory_space<vmem>>, vector<64x32xf32>
    %cst = arith.constant dense<0.000000e+00> : vector<8x32xf32>
    %9 = tpu.matmul %7, %8, %cst {dimension_numbers = #tpu.dot_dimension_numbers<[1], [0], [0], [1], [0, 0, 1, 1], [], []>} : vector<8x64xf32>, vector<64x32xf32>, vector<8x32xf32> -> vector<8x32xf32>
    %10 = vector.broadcast %5 : vector<1x32xf32> to vector<8x32xf32>
    %11 = arith.addf %9, %10 : vector<8x32xf32>
    %12 = vector.shape_cast %4 : vector<8x8x32xf32> to vector<64x32xf32>
    %c64 = arith.constant 64 : index
    %c0_15 = arith.constant 0 : index
    %13 = vector.load %arg3[%c64, %c0_15] : memref<96x32xf32, #tpu.memory_space<vmem>>, vector<32x32xf32>
    %cst_16 = arith.constant dense<0.000000e+00> : vector<64x32xf32>
    %14 = tpu.matmul %12, %13, %cst_16 {dimension_numbers = #tpu.dot_dimension_numbers<[1], [0], [0], [1], [0, 0, 1, 1], [], []>} : vector<64x32xf32>, vector<32x32xf32>, vector<64x32xf32> -> vector<64x32xf32>
    %15 = vector.shape_cast %14 : vector<64x32xf32> to vector<8x8x32xf32>
    %16 = vector.shape_cast %11 : vector<8x32xf32> to vector<8x1x32xf32>
    %17 = vector.broadcast %16 : vector<8x1x32xf32> to vector<8x8x32xf32>
    %18 = arith.addf %15, %17 : vector<8x8x32xf32>
    %19 = math.tanh %18 : vector<8x8x32xf32>
    %20 = vector.shape_cast %6 : vector<1x32xf32> to vector<1x1x32xf32>
    %21 = vector.broadcast %20 : vector<1x1x32xf32> to vector<8x8x32xf32>
    %22 = arith.mulf %19, %21 : vector<8x8x32xf32>
    %cst_17 = arith.constant dense<0.000000e+00> : vector<8x8xf32>
    %23 = vector.multi_reduction <add>, %22, %cst_17 [2] : vector<8x8x32xf32> to vector<8x8xf32>
    %24 = vector.shape_cast %23 : vector<8x8xf32> to vector<8x8x1xf32>
    %cst_18 = arith.constant dense<0xFF800000> : vector<8x1xf32>
    %25 = vector.multi_reduction <maximumf>, %24, %cst_18 [1] : vector<8x8x1xf32> to vector<8x1xf32>
    %26 = vector.shape_cast %25 : vector<8x1xf32> to vector<8x1x1xf32>
    %27 = vector.broadcast %26 : vector<8x1x1xf32> to vector<8x8x1xf32>
    %28 = arith.subf %24, %27 : vector<8x8x1xf32>
    %29 = math.exp %28 : vector<8x8x1xf32>
    %cst_19 = arith.constant dense<0.000000e+00> : vector<8x1xf32>
    %30 = vector.multi_reduction <add>, %29, %cst_19 [1] : vector<8x8x1xf32> to vector<8x1xf32>
    %31 = vector.shape_cast %30 : vector<8x1xf32> to vector<8x1x1xf32>
    %32 = vector.broadcast %31 : vector<8x1x1xf32> to vector<8x8x1xf32>
    %33 = arith.divf %29, %32 : vector<8x8x1xf32>
    %34 = vector.broadcast %33 : vector<8x8x1xf32> to vector<8x8x32xf32>
    %35 = arith.mulf %34, %4 : vector<8x8x32xf32>
    %cst_20 = arith.constant dense<0.000000e+00> : vector<8x32xf32>
    %36 = vector.multi_reduction <add>, %35, %cst_20 [1] : vector<8x8x32xf32> to vector<8x32xf32>
    %c0_21 = arith.constant 0 : index
    %c0_22 = arith.constant 0 : index
    %37 = vector.load %arg0[%c0_21, %c0_22] : memref<8x32xf32, #tpu.memory_space<vmem>>, vector<8x32xf32>
    %38 = tpu.concatenate %37, %36, %1 in 1 : vector<8x32xf32>, vector<8x32xf32>, vector<8x32xf32> -> vector<8x96xf32>
    %c0_23 = arith.constant 0 : index
    %c0_24 = arith.constant 0 : index
    %39 = vector.load %arg4[%c0_23, %c0_24] : memref<96x128xf32, #tpu.memory_space<vmem>>, vector<96x128xf32>
    %cst_25 = arith.constant dense<0.000000e+00> : vector<8x128xf32>
    %40 = tpu.matmul %38, %39, %cst_25 {dimension_numbers = #tpu.dot_dimension_numbers<[1], [0], [0], [1], [0, 0, 1, 1], [], []>} : vector<8x96xf32>, vector<96x128xf32>, vector<8x128xf32> -> vector<8x128xf32>
    %c2 = arith.constant 2 : index
    %c0_26 = arith.constant 0 : index
    %41 = vector.load %arg6[%c2, %c0_26] : memref<6x128xf32, #tpu.memory_space<vmem>>, vector<1x128xf32>
    %42 = vector.broadcast %41 : vector<1x128xf32> to vector<8x128xf32>
    %43 = arith.addf %40, %42 : vector<8x128xf32>
    %44 = vector.extract_strided_slice %43 {offsets = [0, 0], sizes = [8, 32], strides = [1, 1]} : vector<8x128xf32> to vector<8x32xf32>
    %45 = arith.negf %44 : vector<8x32xf32>
    %46 = math.exp %45 : vector<8x32xf32>
    %cst_27 = arith.constant 1.000000e+00 : f32
    %47 = vector.broadcast %cst_27 : f32 to vector<8x32xf32>
    %48 = arith.addf %47, %46 : vector<8x32xf32>
    %49 = arith.divf %47, %48 : vector<8x32xf32>
    %50 = vector.extract_strided_slice %43 {offsets = [0, 32], sizes = [8, 32], strides = [1, 1]} : vector<8x128xf32> to vector<8x32xf32>
    %51 = arith.negf %50 : vector<8x32xf32>
    %52 = math.exp %51 : vector<8x32xf32>
    %cst_28 = arith.constant 1.000000e+00 : f32
    %53 = vector.broadcast %cst_28 : f32 to vector<8x32xf32>
    %54 = arith.addf %53, %52 : vector<8x32xf32>
    %55 = arith.divf %53, %54 : vector<8x32xf32>
    %56 = vector.extract_strided_slice %43 {offsets = [0, 64], sizes = [8, 32], strides = [1, 1]} : vector<8x128xf32> to vector<8x32xf32>
    %57 = math.tanh %56 : vector<8x32xf32>
    %58 = vector.extract_strided_slice %43 {offsets = [0, 96], sizes = [8, 32], strides = [1, 1]} : vector<8x128xf32> to vector<8x32xf32>
    %59 = arith.negf %58 : vector<8x32xf32>
    %60 = math.exp %59 : vector<8x32xf32>
    %cst_29 = arith.constant 1.000000e+00 : f32
    %61 = vector.broadcast %cst_29 : f32 to vector<8x32xf32>
    %62 = arith.addf %61, %60 : vector<8x32xf32>
    %63 = arith.divf %61, %62 : vector<8x32xf32>
    %64 = arith.mulf %55, %3 : vector<8x32xf32>
    %65 = arith.mulf %49, %57 : vector<8x32xf32>
    %66 = arith.addf %64, %65 : vector<8x32xf32>
    %67 = math.tanh %66 : vector<8x32xf32>
    %68 = arith.mulf %63, %67 : vector<8x32xf32>
    %c0_30 = arith.constant 0 : index
    %c0_31 = arith.constant 0 : index
    %c0_32 = arith.constant 0 : index
    %c0_33 = arith.constant 0 : index
    %69 = vector.load %arg9[%c0_30, %c0_31, %c0_32, %c0_33] : memref<2x3x8x32xf32, #tpu.memory_space<vmem>>, vector<1x1x8x32xf32>
    %70 = vector.shape_cast %69 : vector<1x1x8x32xf32> to vector<8x32xf32>
    %71 = vector.shape_cast %68 : vector<8x32xf32> to vector<1x1x8x32xf32>
    tpu.vector_store %arg9[%c0_30, %c0_31, %c0_32, %c0_33], %71 {strides = array<i32>} : memref<2x3x8x32xf32, #tpu.memory_space<vmem>>, vector<1x1x8x32xf32>,
    %c1_34 = arith.constant 1 : index
    %c0_35 = arith.constant 0 : index
    %c0_36 = arith.constant 0 : index
    %c0_37 = arith.constant 0 : index
    %72 = vector.load %arg9[%c1_34, %c0_35, %c0_36, %c0_37] : memref<2x3x8x32xf32, #tpu.memory_space<vmem>>, vector<1x1x8x32xf32>
    %73 = vector.shape_cast %72 : vector<1x1x8x32xf32> to vector<8x32xf32>
    %74 = vector.shape_cast %66 : vector<8x32xf32> to vector<1x1x8x32xf32>
    tpu.vector_store %arg9[%c1_34, %c0_35, %c0_36, %c0_37], %74 {strides = array<i32>} : memref<2x3x8x32xf32, #tpu.memory_space<vmem>>, vector<1x1x8x32xf32>,
    %c0_38 = arith.constant 0 : index
    %c1_39 = arith.constant 1 : index
    %c0_40 = arith.constant 0 : index
    %c0_41 = arith.constant 0 : index
    %75 = vector.load %arg1[%c0_38, %c1_39, %c0_40, %c0_41] : memref<2x3x8x32xf32, #tpu.memory_space<vmem>>, vector<1x1x8x32xf32>
    %76 = vector.shape_cast %75 : vector<1x1x8x32xf32> to vector<8x32xf32>
    %c1_42 = arith.constant 1 : index
    %c1_43 = arith.constant 1 : index
    %c0_44 = arith.constant 0 : index
    %c0_45 = arith.constant 0 : index
    %77 = vector.load %arg1[%c1_42, %c1_43, %c0_44, %c0_45] : memref<2x3x8x32xf32, #tpu.memory_space<vmem>>, vector<1x1x8x32xf32>
    %78 = vector.shape_cast %77 : vector<1x1x8x32xf32> to vector<8x32xf32>
    %79 = tpu.concatenate %68, %76 in 1 : vector<8x32xf32>, vector<8x32xf32> -> vector<8x64xf32>
    %c0_46 = arith.constant 0 : index
    %c0_47 = arith.constant 0 : index
    %c0_48 = arith.constant 0 : index
    %80 = vector.load %arg5[%c0_46, %c0_47, %c0_48] : memref<2x64x128xf32, #tpu.memory_space<vmem>>, vector<1x64x128xf32>
    %81 = vector.shape_cast %80 : vector<1x64x128xf32> to vector<64x128xf32>
    %cst_49 = arith.constant dense<0.000000e+00> : vector<8x128xf32>
    %82 = tpu.matmul %79, %81, %cst_49 {dimension_numbers = #tpu.dot_dimension_numbers<[1], [0], [0], [1], [0, 0, 1, 1], [], []>} : vector<8x64xf32>, vector<64x128xf32>, vector<8x128xf32> -> vector<8x128xf32>
    %c3 = arith.constant 3 : index
    %c0_50 = arith.constant 0 : index
    %83 = vector.load %arg6[%c3, %c0_50] : memref<6x128xf32, #tpu.memory_space<vmem>>, vector<1x128xf32>
    %84 = vector.broadcast %83 : vector<1x128xf32> to vector<8x128xf32>
    %85 = arith.addf %82, %84 : vector<8x128xf32>
    %86 = vector.extract_strided_slice %85 {offsets = [0, 0], sizes = [8, 32], strides = [1, 1]} : vector<8x128xf32> to vector<8x32xf32>
    %87 = arith.negf %86 : vector<8x32xf32>
    %88 = math.exp %87 : vector<8x32xf32>
    %cst_51 = arith.constant 1.000000e+00 : f32
    %89 = vector.broadcast %cst_51 : f32 to vector<8x32xf32>
    %90 = arith.addf %89, %88 : vector<8x32xf32>
    %91 = arith.divf %89, %90 : vector<8x32xf32>
    %92 = vector.extract_strided_slice %85 {offsets = [0, 32], sizes = [8, 32], strides = [1, 1]} : vector<8x128xf32> to vector<8x32xf32>
    %93 = arith.negf %92 : vector<8x32xf32>
    %94 = math.exp %93 : vector<8x32xf32>
    %cst_52 = arith.constant 1.000000e+00 : f32
    %95 = vector.broadcast %cst_52 : f32 to vector<8x32xf32>
    %96 = arith.addf %95, %94 : vector<8x32xf32>
    %97 = arith.divf %95, %96 : vector<8x32xf32>
    %98 = vector.extract_strided_slice %85 {offsets = [0, 64], sizes = [8, 32], strides = [1, 1]} : vector<8x128xf32> to vector<8x32xf32>
    %99 = math.tanh %98 : vector<8x32xf32>
    %100 = vector.extract_strided_slice %85 {offsets = [0, 96], sizes = [8, 32], strides = [1, 1]} : vector<8x128xf32> to vector<8x32xf32>
    %101 = arith.negf %100 : vector<8x32xf32>
    %102 = math.exp %101 : vector<8x32xf32>
    %cst_53 = arith.constant 1.000000e+00 : f32
    %103 = vector.broadcast %cst_53 : f32 to vector<8x32xf32>
    %104 = arith.addf %103, %102 : vector<8x32xf32>
    %105 = arith.divf %103, %104 : vector<8x32xf32>
    %106 = arith.mulf %97, %78 : vector<8x32xf32>
    %107 = arith.mulf %91, %99 : vector<8x32xf32>
    %108 = arith.addf %106, %107 : vector<8x32xf32>
    %109 = math.tanh %108 : vector<8x32xf32>
    %110 = arith.mulf %105, %109 : vector<8x32xf32>
    %c0_54 = arith.constant 0 : index
    %c1_55 = arith.constant 1 : index
    %c0_56 = arith.constant 0 : index
    %c0_57 = arith.constant 0 : index
    %111 = vector.load %arg9[%c0_54, %c1_55, %c0_56, %c0_57] : memref<2x3x8x32xf32, #tpu.memory_space<vmem>>, vector<1x1x8x32xf32>
    %112 = vector.shape_cast %111 : vector<1x1x8x32xf32> to vector<8x32xf32>
    %113 = vector.shape_cast %110 : vector<8x32xf32> to vector<1x1x8x32xf32>
    tpu.vector_store %arg9[%c0_54, %c1_55, %c0_56, %c0_57], %113 {strides = array<i32>} : memref<2x3x8x32xf32, #tpu.memory_space<vmem>>, vector<1x1x8x32xf32>,
    %c1_58 = arith.constant 1 : index
    %c1_59 = arith.constant 1 : index
    %c0_60 = arith.constant 0 : index
    %c0_61 = arith.constant 0 : index
    %114 = vector.load %arg9[%c1_58, %c1_59, %c0_60, %c0_61] : memref<2x3x8x32xf32, #tpu.memory_space<vmem>>, vector<1x1x8x32xf32>
    %115 = vector.shape_cast %114 : vector<1x1x8x32xf32> to vector<8x32xf32>
    %116 = vector.shape_cast %108 : vector<8x32xf32> to vector<1x1x8x32xf32>
    tpu.vector_store %arg9[%c1_58, %c1_59, %c0_60, %c0_61], %116 {strides = array<i32>} : memref<2x3x8x32xf32, #tpu.memory_space<vmem>>, vector<1x1x8x32xf32>,
    %c0_62 = arith.constant 0 : index
    %c2_63 = arith.constant 2 : index
    %c0_64 = arith.constant 0 : index
    %c0_65 = arith.constant 0 : index
    %117 = vector.load %arg1[%c0_62, %c2_63, %c0_64, %c0_65] : memref<2x3x8x32xf32, #tpu.memory_space<vmem>>, vector<1x1x8x32xf32>
    %118 = vector.shape_cast %117 : vector<1x1x8x32xf32> to vector<8x32xf32>
    %c1_66 = arith.constant 1 : index
    %c2_67 = arith.constant 2 : index
    %c0_68 = arith.constant 0 : index
    %c0_69 = arith.constant 0 : index
    %119 = vector.load %arg1[%c1_66, %c2_67, %c0_68, %c0_69] : memref<2x3x8x32xf32, #tpu.memory_space<vmem>>, vector<1x1x8x32xf32>
    %120 = vector.shape_cast %119 : vector<1x1x8x32xf32> to vector<8x32xf32>
    %121 = tpu.concatenate %110, %118 in 1 : vector<8x32xf32>, vector<8x32xf32> -> vector<8x64xf32>
    %c1_70 = arith.constant 1 : index
    %c0_71 = arith.constant 0 : index
    %c0_72 = arith.constant 0 : index
    %122 = vector.load %arg5[%c1_70, %c0_71, %c0_72] : memref<2x64x128xf32, #tpu.memory_space<vmem>>, vector<1x64x128xf32>
    %123 = vector.shape_cast %122 : vector<1x64x128xf32> to vector<64x128xf32>
    %cst_73 = arith.constant dense<0.000000e+00> : vector<8x128xf32>
    %124 = tpu.matmul %121, %123, %cst_73 {dimension_numbers = #tpu.dot_dimension_numbers<[1], [0], [0], [1], [0, 0, 1, 1], [], []>} : vector<8x64xf32>, vector<64x128xf32>, vector<8x128xf32> -> vector<8x128xf32>
    %c4 = arith.constant 4 : index
    %c0_74 = arith.constant 0 : index
    %125 = vector.load %arg6[%c4, %c0_74] : memref<6x128xf32, #tpu.memory_space<vmem>>, vector<1x128xf32>
    %126 = vector.broadcast %125 : vector<1x128xf32> to vector<8x128xf32>
    %127 = arith.addf %124, %126 : vector<8x128xf32>
    %128 = vector.extract_strided_slice %127 {offsets = [0, 0], sizes = [8, 32], strides = [1, 1]} : vector<8x128xf32> to vector<8x32xf32>
    %129 = arith.negf %128 : vector<8x32xf32>
    %130 = math.exp %129 : vector<8x32xf32>
    %cst_75 = arith.constant 1.000000e+00 : f32
    %131 = vector.broadcast %cst_75 : f32 to vector<8x32xf32>
    %132 = arith.addf %131, %130 : vector<8x32xf32>
    %133 = arith.divf %131, %132 : vector<8x32xf32>
    %134 = vector.extract_strided_slice %127 {offsets = [0, 32], sizes = [8, 32], strides = [1, 1]} : vector<8x128xf32> to vector<8x32xf32>
    %135 = arith.negf %134 : vector<8x32xf32>
    %136 = math.exp %135 : vector<8x32xf32>
    %cst_76 = arith.constant 1.000000e+00 : f32
    %137 = vector.broadcast %cst_76 : f32 to vector<8x32xf32>
    %138 = arith.addf %137, %136 : vector<8x32xf32>
    %139 = arith.divf %137, %138 : vector<8x32xf32>
    %140 = vector.extract_strided_slice %127 {offsets = [0, 64], sizes = [8, 32], strides = [1, 1]} : vector<8x128xf32> to vector<8x32xf32>
    %141 = math.tanh %140 : vector<8x32xf32>
    %142 = vector.extract_strided_slice %127 {offsets = [0, 96], sizes = [8, 32], strides = [1, 1]} : vector<8x128xf32> to vector<8x32xf32>
    %143 = arith.negf %142 : vector<8x32xf32>
    %144 = math.exp %143 : vector<8x32xf32>
    %cst_77 = arith.constant 1.000000e+00 : f32
    %145 = vector.broadcast %cst_77 : f32 to vector<8x32xf32>
    %146 = arith.addf %145, %144 : vector<8x32xf32>
    %147 = arith.divf %145, %146 : vector<8x32xf32>
    %148 = arith.mulf %139, %120 : vector<8x32xf32>
    %149 = arith.mulf %133, %141 : vector<8x32xf32>
    %150 = arith.addf %148, %149 : vector<8x32xf32>
    %151 = math.tanh %150 : vector<8x32xf32>
    %152 = arith.mulf %147, %151 : vector<8x32xf32>
    %c0_78 = arith.constant 0 : index
    %c2_79 = arith.constant 2 : index
    %c0_80 = arith.constant 0 : index
    %c0_81 = arith.constant 0 : index
    %153 = vector.load %arg9[%c0_78, %c2_79, %c0_80, %c0_81] : memref<2x3x8x32xf32, #tpu.memory_space<vmem>>, vector<1x1x8x32xf32>
    %154 = vector.shape_cast %153 : vector<1x1x8x32xf32> to vector<8x32xf32>
    %155 = vector.shape_cast %152 : vector<8x32xf32> to vector<1x1x8x32xf32>
    tpu.vector_store %arg9[%c0_78, %c2_79, %c0_80, %c0_81], %155 {strides = array<i32>} : memref<2x3x8x32xf32, #tpu.memory_space<vmem>>, vector<1x1x8x32xf32>,
    %c1_82 = arith.constant 1 : index
    %c2_83 = arith.constant 2 : index
    %c0_84 = arith.constant 0 : index
    %c0_85 = arith.constant 0 : index
    %156 = vector.load %arg9[%c1_82, %c2_83, %c0_84, %c0_85] : memref<2x3x8x32xf32, #tpu.memory_space<vmem>>, vector<1x1x8x32xf32>
    %157 = vector.shape_cast %156 : vector<1x1x8x32xf32> to vector<8x32xf32>
    %158 = vector.shape_cast %150 : vector<8x32xf32> to vector<1x1x8x32xf32>
    tpu.vector_store %arg9[%c1_82, %c2_83, %c0_84, %c0_85], %158 {strides = array<i32>} : memref<2x3x8x32xf32, #tpu.memory_space<vmem>>, vector<1x1x8x32xf32>,
    %c0_86 = arith.constant 0 : index
    %c0_87 = arith.constant 0 : index
    %159 = vector.load %arg7[%c0_86, %c0_87] : memref<32x128xf32, #tpu.memory_space<vmem>>, vector<32x128xf32>
    %cst_88 = arith.constant dense<0.000000e+00> : vector<8x128xf32>
    %160 = tpu.matmul %152, %159, %cst_88 {dimension_numbers = #tpu.dot_dimension_numbers<[1], [0], [0], [1], [0, 0, 1, 1], [], []>} : vector<8x32xf32>, vector<32x128xf32>, vector<8x128xf32> -> vector<8x128xf32>
    %c5 = arith.constant 5 : index
    %c0_89 = arith.constant 0 : index
    %161 = vector.load %arg6[%c5, %c0_89] : memref<6x128xf32, #tpu.memory_space<vmem>>, vector<1x128xf32>
    %162 = vector.broadcast %161 : vector<1x128xf32> to vector<8x128xf32>
    %163 = arith.addf %160, %162 : vector<8x128xf32>
    %cst_90 = arith.constant dense<0xFF800000> : vector<8xf32>
    %164 = vector.multi_reduction <maximumf>, %163, %cst_90 [1] : vector<8x128xf32> to vector<8xf32>
    %165 = vector.shape_cast %164 : vector<8xf32> to vector<8x1xf32>
    %166 = vector.broadcast %165 : vector<8x1xf32> to vector<8x128xf32>
    %167 = arith.subf %163, %166 : vector<8x128xf32>
    %168 = math.exp %167 : vector<8x128xf32>
    %cst_91 = arith.constant dense<0.000000e+00> : vector<8xf32>
    %169 = vector.multi_reduction <add>, %168, %cst_91 [1] : vector<8x128xf32> to vector<8xf32>
    %170 = vector.shape_cast %169 : vector<8xf32> to vector<8x1xf32>
    %171 = math.log %170 : vector<8x1xf32>
    %172 = vector.broadcast %171 : vector<8x1xf32> to vector<8x128xf32>
    %173 = arith.subf %167, %172 : vector<8x128xf32>
    %c0_92 = arith.constant 0 : index
    %c0_93 = arith.constant 0 : index
    %174 = vector.load %arg8[%c0_92, %c0_93] : memref<8x128xf32, #tpu.memory_space<vmem>>, vector<8x128xf32>
    tpu.vector_store %arg8[%c0_92, %c0_93], %173 {strides = array<i32>} : memref<8x128xf32, #tpu.memory_space<vmem>>, vector<8x128xf32>,
    return
  }
}

</mosaic_0001>

<llo_original>
// kernel: tpu_custom_call.1
$region0: #{tpu_custom_call.1}
  #allocation0 [shape = 'u32[]', space=smem, size = 0x4, offset = 0x4, fixed_abs, tag = 'smem constant byte address 0x4 - core index']
  #allocation1 [shape = 'u32[144,128]{1,0:T(1,128)}', space=vmem, size = 0x12000, scoped, tag = 'internal scratch']
  %s0 = inlined_call_operand.vmem [shape: f32[8,32], index: 0, kind: input, shape index: {}]
  %s1 = inlined_call_operand.hbm [shape: f32[2,3,8,32], index: 1, kind: input, shape index: {}, may-alias: {1,9}]
  %s2 = inlined_call_operand.hbm [shape: f32[8,8,32], index: 2, kind: input, shape index: {}]
  %s3 = inlined_call_operand.vmem [shape: f32[96,32], index: 3, kind: input, shape index: {}]
  %s4 = inlined_call_operand.vmem [shape: f32[96,128], index: 4, kind: input, shape index: {}]
  %s5 = inlined_call_operand.vmem [shape: f32[2,64,128], index: 5, kind: input, shape index: {}]
  %s6 = inlined_call_operand.hbm [shape: f32[6,128], index: 6, kind: input, shape index: {}]
  %s7 = inlined_call_operand.hbm [shape: f32[32,128], index: 7, kind: input, shape index: {}]
  %s8 = inlined_call_operand.hbm [shape: f32[8,128], index: 8, kind: output, shape index: {0}]
  %s9 = inlined_call_operand.hbm [shape: f32[2,3,8,32], index: 9, kind: output, shape index: {1}, may-alias: {1,9}]
  %10 = xla_tuple %s8, %s9
  %s11 = sld [smem:[#allocation0]]
  $region66: #{tpu_custom_call.1} parent=0
    _
  %s13 = ssub.s32 1, %s11
  %s14 = scalar_select 0, %s13, %s11
  $region1: #{tpu_custom_call.1} parent=0
    #allocation2 [shape = 'u8[24576]{0}', space=vmem, size = 0x6000, scoped, tag = 'input window, operand 1, single buffered']
    #allocation3 [shape = 's32[1]{0}', space=sflag, size = 0x4, scoped, tag = 'scoped memory for tpu_custom_call.1']
    #allocation4 [shape = 's32[1]{0}', space=sflag, size = 0x4, scoped, tag = 'scoped memory for tpu_custom_call.1']
    #allocation5 [shape = 'u8[32768]{0}', space=vmem, size = 0x8000, scoped, tag = 'input window, operand 2, single buffered']
    #allocation6 [shape = 's32[1]{0}', space=sflag, size = 0x4, scoped, tag = 'scoped memory for tpu_custom_call.1']
    #allocation7 [shape = 'u8[4096]{0}', space=vmem, size = 0x1000, scoped, tag = 'input window, operand 6, single buffered']
    #allocation8 [shape = 'u8[16384]{0}', space=vmem, size = 0x4000, scoped, tag = 'input window, operand 7, single buffered']
    #allocation9 [shape = 's32[1]{0}', space=sflag, size = 0x4, scoped, tag = 'scoped memory for tpu_custom_call.1']
    #allocation10 [shape = 'u8[4096]{0}', space=vmem, size = 0x1000, scoped, tag = 'output window, operand 0, single buffered']
    #allocation11 [shape = 'u8[24576]{0}', space=vmem, size = 0x6000, scoped, tag = 'output window, operand 1, single buffered']
    #allocation12 [shape = 's32[1]{0}', space=sflag, size = 0x4, scoped, tag = 'scoped memory for tpu_custom_call.1']
    %15 = vsyncpa [#allocation3], 0
    %16 = vsyncpa [#allocation6], 0
    %17 = vsyncpa [#allocation9], 0
    %18 = vsyncpa [#allocation4], 0
    %19 = vsyncpa [#allocation12], 0
    // Predicated region
    $region2: #{tpu_custom_call.1} parent=1 // pred_check
      _
    $region3: #{tpu_custom_call.1} parent=1 // pred_check_branch
      %21 = sbr.rel (0) target = $region5
    $region4: #{tpu_custom_call.1} parent=1 // pred_region
      _
    $region5: #{tpu_custom_call.1} parent=1 // pred_fallthru
      _
    // Predicated region
    $region6: #{tpu_custom_call.1} parent=1 // pred_check
      _
    $region7: #{tpu_custom_call.1} parent=1 // pred_check_branch
      %23 = sbr.rel (0) target = $region9
    $region8: #{tpu_custom_call.1} parent=1 // pred_region
      %s25 = ssub.s32 768, 768
      %26 = vsyncadd [#allocation3], %s25
      %s27 = sshll.u32 [#allocation2], 4
      %s28 = int_to_ptr.vmem [resolvable:$true] %s27
      %33 = dma.hbm_to_vmem [thread:$0]  %s1, 768, %s28, [#allocation3], 128, 128, 8
    $region9: #{tpu_custom_call.1} parent=1 // pred_fallthru
      _
    // Predicated region
    $region10: #{tpu_custom_call.1} parent=1 // pred_check
      _
    $region11: #{tpu_custom_call.1} parent=1 // pred_check_branch
      %35 = sbr.rel (0) target = $region13
    $region12: #{tpu_custom_call.1} parent=1 // pred_region
      %s37 = ssub.s32 1024, 1024
      %38 = vsyncadd [#allocation6], %s37
      %s39 = sshll.u32 [#allocation5], 4
      %s40 = int_to_ptr.vmem [resolvable:$true] %s39
      %45 = dma.hbm_to_vmem [thread:$0]  %s2, 1024, %s40, [#allocation6], 128, 128, 8
    $region13: #{tpu_custom_call.1} parent=1 // pred_fallthru
      _
    // Predicated region
    $region14: #{tpu_custom_call.1} parent=1 // pred_check
      _
    $region15: #{tpu_custom_call.1} parent=1 // pred_check_branch
      %47 = sbr.rel (0) target = $region17
    $region16: #{tpu_custom_call.1} parent=1 // pred_region
      _
    $region17: #{tpu_custom_call.1} parent=1 // pred_fallthru
      _
    // Predicated region
    $region18: #{tpu_custom_call.1} parent=1 // pred_check
      _
    $region19: #{tpu_custom_call.1} parent=1 // pred_check_branch
      %49 = sbr.rel (0) target = $region21
    $region20: #{tpu_custom_call.1} parent=1 // pred_region
      _
    $region21: #{tpu_custom_call.1} parent=1 // pred_fallthru
      _
    // Predicated region
    $region22: #{tpu_custom_call.1} parent=1 // pred_check
      _
    $region23: #{tpu_custom_call.1} parent=1 // pred_check_branch
      %51 = sbr.rel (0) target = $region25
    $region24: #{tpu_custom_call.1} parent=1 // pred_region
      _
    $region25: #{tpu_custom_call.1} parent=1 // pred_fallthru
      _
    // Predicated region
    $region26: #{tpu_custom_call.1} parent=1 // pred_check
      _
    $region27: #{tpu_custom_call.1} parent=1 // pred_check_branch
      %53 = sbr.rel (0) target = $region29
    $region28: #{tpu_custom_call.1} parent=1 // pred_region
      %s55 = ssub.s32 128, 128
      %56 = vsyncadd [#allocation6], %s55
      %s58 = sshll.u32 [#allocation7], 4
      %s59 = int_to_ptr.vmem [resolvable:$true] %s58
      %61 = dma.hbm_to_vmem [thread:$0]  %s6, 128, %s59, [#allocation6]
    $region29: #{tpu_custom_call.1} parent=1 // pred_fallthru
      _
    // Predicated region
    $region30: #{tpu_custom_call.1} parent=1 // pred_check
      _
    $region31: #{tpu_custom_call.1} parent=1 // pred_check_branch
      %63 = sbr.rel (0) target = $region33
    $region32: #{tpu_custom_call.1} parent=1 // pred_region
      %s65 = ssub.s32 512, 512
      %66 = vsyncadd [#allocation9], %s65
      %s67 = sshll.u32 [#allocation8], 4
      %s68 = int_to_ptr.vmem [resolvable:$true] %s67
      %73 = dma.hbm_to_vmem [thread:$0]  %s7, 512, %s68, [#allocation9], 128, 128, 8
    $region33: #{tpu_custom_call.1} parent=1 // pred_fallthru
      _
    // Predicated region
    $region34: #{tpu_custom_call.1} parent=1 // pred_check
      _
    $region35: #{tpu_custom_call.1} parent=1 // pred_check_branch
      %75 = sbr.rel (0) target = $region37
    $region36: #{tpu_custom_call.1} parent=1 // pred_region
      %76 = dma.done [#allocation3], 768
    $region37: #{tpu_custom_call.1} parent=1 // pred_fallthru
      _
    // Predicated region
    $region38: #{tpu_custom_call.1} parent=1 // pred_check
      _
    $region39: #{tpu_custom_call.1} parent=1 // pred_check_branch
      %78 = sbr.rel (0) target = $region41
    $region40: #{tpu_custom_call.1} parent=1 // pred_region
      %79 = dma.done [#allocation6], 1024
    $region41: #{tpu_custom_call.1} parent=1 // pred_fallthru
      _
    // Predicated region
    $region42: #{tpu_custom_call.1} parent=1 // pred_check
      _
    $region43: #{tpu_custom_call.1} parent=1 // pred_check_branch
      %81 = sbr.rel (0) target = $region45
    $region44: #{tpu_custom_call.1} parent=1 // pred_region
      %82 = dma.done [#allocation6], 128
    $region45: #{tpu_custom_call.1} parent=1 // pred_fallthru
      _
    // Predicated region
    $region46: #{tpu_custom_call.1} parent=1 // pred_check
      _
    $region47: #{tpu_custom_call.1} parent=1 // pred_check_branch
      %84 = sbr.rel (0) target = $region49
    $region48: #{tpu_custom_call.1} parent=1 // pred_region
      %85 = dma.done [#allocation9], 512
    $region49: #{tpu_custom_call.1} parent=1 // pred_fallthru
      _
    %v86 = vld [vmem:[#allocation2] sm:$0xff]
    %s87 = scalar_lea.vmem [#allocation2], 24
    %v88 = vld [vmem:[%s87] sm:$0xff]
    %v89 = vld [vmem:[#allocation5] sm:$0xff]
    %v90 = vld [vmem:[#allocation5 + $0x8] sm:$0xff]
    %v91 = vld [vmem:[#allocation5 + $0x10] sm:$0xff]
    %v92 = vld [vmem:[#allocation5 + $0x18] sm:$0xff]
    %v93 = vld [vmem:[#allocation5 + $0x20] sm:$0xff]
    %v94 = vld [vmem:[#allocation5 + $0x28] sm:$0xff]
    %v95 = vld [vmem:[#allocation5 + $0x30] sm:$0xff]
    %v96 = vld [vmem:[#allocation5 + $0x38] sm:$0xff]
    %v97 = vld [vmem:[#allocation7] sm:$0x1]
    %v98 = vld [vmem:[#allocation7 + $0x1] sm:$0x1]
    %100 = vrot.lane.b32.xlu0 %v88, 32
    %v101 = vpop.permute.xlu0 %100
    %vm103 = vcmask 261120
    %v104 = vsel %vm103, %v86, %v101
    %v105 = vld [vmem:[%s3] sm:$0xff]
    %v106 = vld [vmem:[%s3 + $0x8] sm:$0xff]
    %v107 = vld [vmem:[%s3 + $0x10] sm:$0xff]
    %v108 = vld [vmem:[%s3 + $0x18] sm:$0xff]
    %v109 = vld [vmem:[%s3 + $0x20] sm:$0xff]
    %v110 = vld [vmem:[%s3 + $0x28] sm:$0xff]
    %v111 = vld [vmem:[%s3 + $0x30] sm:$0xff]
    %v112 = vld [vmem:[%s3 + $0x38] sm:$0xff]
    %v113 = vlaneseq
    %v114 = vshrl.u32 %v113, 7
    %v115 = vsub.s32 0, %v114
    %v116 = vrot.slane %v97, %v115
    %vm117 = vcmask 523264
    %v119 = vsel %vm117, %v104, 0
    %121 = vmatprep.subr.mxu0 0.0
    %122 = vmatpush1.msra.mxu0 %v105
    %123 = vmatprep.subr.mxu0 0.0
    %124 = vmatpush1.msra.mxu0 %v106
    %125 = vmatprep.subr.mxu0 0.0
    %126 = vmatpush1.msra.mxu0 %v107
    %127 = vmatprep.subr.mxu0 0.0
    %128 = vmatpush1.msra.mxu0 %v108
    %129 = vmatprep.subr.mxu0 0.0
    %130 = vmatpush1.msra.mxu0 %v109
    %131 = vmatprep.subr.mxu0 0.0
    %132 = vmatpush1.msra.mxu0 %v110
    %133 = vmatprep.subr.mxu0 0.0
    %134 = vmatpush1.msra.mxu0 %v111
    %135 = vmatprep.subr.mxu0 0.0
    %136 = vmatpush1.msra.mxu0 %v112
    %137 = vmatprep.subr.mxu0 0.0
    %138 = vmatpush1.msra.mxu0 0.0
    %139 = vmatprep.subr.mxu0 0.0
    %140 = vmatpush1.msra.mxu0 0.0
    %141 = vmatprep.subr.mxu0 0.0
    %142 = vmatpush1.msra.mxu0 0.0
    %143 = vmatprep.subr.mxu0 0.0
    %144 = vmatpush1.msra.mxu0 0.0
    %145 = vmatprep.subr.mxu0 0.0
    %146 = vmatpush1.msra.mxu0 0.0
    %147 = vmatprep.subr.mxu0 0.0
    %148 = vmatpush1.msra.mxu0 0.0
    %149 = vmatprep.subr.mxu0 0.0
    %150 = vmatpush1.msra.mxu0 0.0
    %151 = vmatprep.subr.mxu0 0.0
    %152 = vmatpush1.msra.mxu0 0.0
    %153 = vmatprep.subr.mxu0 0.0
    %154 = vmatpush1.msra.mxu0 0.0
    %155 = vmatprep.subr.mxu0 0.0
    %156 = vmatpush1.msra.mxu0 0.0
    %157 = vmatprep.subr.mxu0 0.0
    %158 = vmatpush1.msra.mxu0 0.0
    %159 = vmatprep.subr.mxu0 0.0
    %160 = vmatpush1.msra.mxu0 0.0
    %161 = vmatprep.subr.mxu0 0.0
    %162 = vmatpush1.msra.mxu0 0.0
    %163 = vmatprep.subr.mxu0 0.0
    %164 = vmatpush1.msra.mxu0 0.0
    %165 = vmatprep.subr.mxu0 0.0
    %166 = vmatpush1.msra.mxu0 0.0
    %167 = vmatprep.subr.mxu0 0.0
    %168 = vmatpush1.msra.mxu0 0.0
    %169 = vmatprep.subr.mxu0 0.0
    %170 = vmatpush1.msra.mxu0 0.0
    %171 = vmatprep.subr.mxu0 0.0
    %172 = vmatpush1.msra.mxu0 0.0
    %173 = vmatprep.subr.mxu0 0.0
    %174 = vmatpush1.msra.mxu0 0.0
    %175 = vmatprep.subr.mxu0 0.0
    %176 = vmatpush1.msra.mxu0 0.0
    %177 = vmatprep.subr.mxu0 0.0
    %178 = vmatpush1.msra.mxu0 0.0
    %179 = vmatprep.subr.mxu0 0.0
    %180 = vmatpush1.msra.mxu0 0.0
    %181 = vmatprep.subr.mxu0 0.0
    %182 = vmatpush1.msra.mxu0 0.0
    %183 = vmatprep.subr.mxu0 0.0
    %184 = vmatpush1.msra.mxu0 0.0
    %185 = vmatprep.mubr.f32.mxu0 0.0
    %186 = vmatmul.mubr.f32.gmra.mrb[0].mxu0 %v119
    %v187 = vpop.f32.mrb[0].mxu0
    %v188 = vadd.f32 %v116, %v187
    %v189 = vpop.f32.mrb[0].mxu0
    %190 = vdwg.mxu0
    %v191 = vld [vmem:[%s3 + $0x40] sm:$0xff]
    %v192 = vld [vmem:[%s3 + $0x48] sm:$0xff]
    %v193 = vld [vmem:[%s3 + $0x50] sm:$0xff]
    %v194 = vld [vmem:[%s3 + $0x58] sm:$0xff]
    %v196 = vsel %vm103, %v89, 0
    %v199 = vsel %vm103, %v90, 0
    %v202 = vsel %vm103, %v91, 0
    %v205 = vsel %vm103, %v92, 0
    %v208 = vsel %vm103, %v93, 0
    %v211 = vsel %vm103, %v94, 0
    %v214 = vsel %vm103, %v95, 0
    %v217 = vsel %vm103, %v96, 0
    %219 = vmatprep.subr.mxu0 0.0
    %220 = vmatpush1.msra.mxu0 %v191
    %221 = vmatprep.subr.mxu0 0.0
    %222 = vmatpush1.msra.mxu0 %v192
    %223 = vmatprep.subr.mxu0 0.0
    %224 = vmatpush1.msra.mxu0 %v193
    %225 = vmatprep.subr.mxu0 0.0
    %226 = vmatpush1.msra.mxu0 %v194
    %227 = vmatprep.subr.mxu0 0.0
    %228 = vmatpush1.msra.mxu0 0.0
    %229 = vmatprep.subr.mxu0 0.0
    %230 = vmatpush1.msra.mxu0 0.0
    %231 = vmatprep.subr.mxu0 0.0
    %232 = vmatpush1.msra.mxu0 0.0
    %233 = vmatprep.subr.mxu0 0.0
    %234 = vmatpush1.msra.mxu0 0.0
    %235 = vmatprep.subr.mxu0 0.0
    %236 = vmatpush1.msra.mxu0 0.0
    %237 = vmatprep.subr.mxu0 0.0
    %238 = vmatpush1.msra.mxu0 0.0
    %239 = vmatprep.subr.mxu0 0.0
    %240 = vmatpush1.msra.mxu0 0.0
    %241 = vmatprep.subr.mxu0 0.0
    %242 = vmatpush1.msra.mxu0 0.0
    %243 = vmatprep.subr.mxu0 0.0
    %244 = vmatpush1.msra.mxu0 0.0
    %245 = vmatprep.subr.mxu0 0.0
    %246 = vmatpush1.msra.mxu0 0.0
    %247 = vmatprep.subr.mxu0 0.0
    %248 = vmatpush1.msra.mxu0 0.0
    %249 = vmatprep.subr.mxu0 0.0
    %250 = vmatpush1.msra.mxu0 0.0
    %251 = vmatprep.subr.mxu0 0.0
    %252 = vmatpush1.msra.mxu0 0.0
    %253 = vmatprep.subr.mxu0 0.0
    %254 = vmatpush1.msra.mxu0 0.0
    %255 = vmatprep.subr.mxu0 0.0
    %256 = vmatpush1.msra.mxu0 0.0
    %257 = vmatprep.subr.mxu0 0.0
    %258 = vmatpush1.msra.mxu0 0.0
    %259 = vmatprep.subr.mxu0 0.0
    %260 = vmatpush1.msra.mxu0 0.0
    %261 = vmatprep.subr.mxu0 0.0
    %262 = vmatpush1.msra.mxu0 0.0
    %263 = vmatprep.subr.mxu0 0.0
    %264 = vmatpush1.msra.mxu0 0.0
    %265 = vmatprep.subr.mxu0 0.0
    %266 = vmatpush1.msra.mxu0 0.0
    %267 = vmatprep.subr.mxu0 0.0
    %268 = vmatpush1.msra.mxu0 0.0
    %269 = vmatprep.subr.mxu0 0.0
    %270 = vmatpush1.msra.mxu0 0.0
    %271 = vmatprep.subr.mxu0 0.0
    %272 = vmatpush1.msra.mxu0 0.0
    %273 = vmatprep.subr.mxu0 0.0
    %274 = vmatpush1.msra.mxu0 0.0
    %275 = vmatprep.subr.mxu0 0.0
    %276 = vmatpush1.msra.mxu0 0.0
    %277 = vmatprep.subr.mxu0 0.0
    %278 = vmatpush1.msra.mxu0 0.0
    %279 = vmatprep.subr.mxu0 0.0
    %280 = vmatpush1.msra.mxu0 0.0
    %281 = vmatprep.subr.mxu0 0.0
    %282 = vmatpush1.msra.mxu0 0.0
    %283 = vmatprep.mubr.f32.mxu0 0.0
    %284 = vmatmul.mubr.f32.gmra.mrb[0].mxu0 %v196
    %v285 = vpop.f32.mrb[0].mxu0
    %v286 = vadd.f32 0.0, %v285
    %v287 = vpop.f32.mrb[0].mxu0
    %288 = vmatprep.mubr.f32.mxu0 0.0
    %289 = vmatmul.mubr.f32.gmra.mrb[0].mxu0 %v199
    %v290 = vpop.f32.mrb[0].mxu0
    %v291 = vadd.f32 0.0, %v290
    %v292 = vpop.f32.mrb[0].mxu0
    %293 = vmatprep.mubr.f32.mxu0 0.0
    %294 = vmatmul.mubr.f32.gmra.mrb[0].mxu0 %v202
    %v295 = vpop.f32.mrb[0].mxu0
    %v296 = vadd.f32 0.0, %v295
    %v297 = vpop.f32.mrb[0].mxu0
    %298 = vmatprep.mubr.f32.mxu0 0.0
    %299 = vmatmul.mubr.f32.gmra.mrb[0].mxu0 %v205
    %v300 = vpop.f32.mrb[0].mxu0
    %v301 = vadd.f32 0.0, %v300
    %v302 = vpop.f32.mrb[0].mxu0
    %303 = vmatprep.mubr.f32.mxu0 0.0
    %304 = vmatmul.mubr.f32.gmra.mrb[0].mxu0 %v208
    %v305 = vpop.f32.mrb[0].mxu0
    %v306 = vadd.f32 0.0, %v305
    %v307 = vpop.f32.mrb[0].mxu0
    %308 = vmatprep.mubr.f32.mxu0 0.0
    %309 = vmatmul.mubr.f32.gmra.mrb[0].mxu0 %v211
    %v310 = vpop.f32.mrb[0].mxu0
    %v311 = vadd.f32 0.0, %v310
    %v312 = vpop.f32.mrb[0].mxu0
    %313 = vmatprep.mubr.f32.mxu0 0.0
    %314 = vmatmul.mubr.f32.gmra.mrb[0].mxu0 %v214
    %v315 = vpop.f32.mrb[0].mxu0
    %v316 = vadd.f32 0.0, %v315
    %v317 = vpop.f32.mrb[0].mxu0
    %318 = vmatprep.mubr.f32.mxu0 0.0
    %319 = vmatmul.mubr.f32.gmra.mrb[0].mxu0 %v217
    %v320 = vpop.f32.mrb[0].mxu0
    %v321 = vadd.f32 0.0, %v320
    %v322 = vpop.f32.mrb[0].mxu0
    %323 = vdwg.mxu0
    %v325 = vcombine.high %v188, %v188
    %v327 = vunpack.c.l.s4 1966171168
    %v328 = vunpack.c.0.s8 %v327
    %v329 = vlaneseq
    %v330 = vshrl.u32 %v329, 7
    %v331 = vsub.s32 %v328, %v330
    %v332 = vrot.slane %v188, %v331
    %v334 = vunpack.c.l.s4 1966171168
    %v335 = vunpack.c.0.s8 %v334
    %v336 = vlaneseq
    %v337 = vshrl.u32 %v336, 7
    %v338 = vsub.s32 %v335, %v337
    %v339 = vrot.slane %v325, %v338
    %v340 = vcombine.high %v332, %v332
    %v341 = vcombine.high %v339, %v339
    %v343 = vunpack.c.l.s4 1966171168
    %v344 = vunpack.c.0.s8 %v343
    %v345 = vlaneseq
    %v346 = vshrl.u32 %v345, 7
    %v347 = vsub.s32 %v344, %v346
    %v348 = vrot.slane %v332, %v347
    %v350 = vunpack.c.l.s4 1966171168
    %v351 = vunpack.c.0.s8 %v350
    %v352 = vlaneseq
    %v353 = vshrl.u32 %v352, 7
    %v354 = vsub.s32 %v351, %v353
    %v355 = vrot.slane %v339, %v354
    %v357 = vunpack.c.l.s4 1966171168
    %v358 = vunpack.c.0.s8 %v357
    %v359 = vlaneseq
    %v360 = vshrl.u32 %v359, 7
    %v361 = vsub.s32 %v358, %v360
    %v362 = vrot.slane %v340, %v361
    %v364 = vunpack.c.l.s4 1966171168
    %v365 = vunpack.c.0.s8 %v364
    %v366 = vlaneseq
    %v367 = vshrl.u32 %v366, 7
    %v368 = vsub.s32 %v365, %v367
    %v369 = vrot.slane %v341, %v368
    %v370 = vcombine.high %v348, %v348
    %v371 = vcombine.high %v355, %v355
    %v372 = vcombine.high %v362, %v362
    %v373 = vcombine.high %v369, %v369
    %v374 = vlaneseq
    %v375 = vshrl.u32 %v374, 7
    %v376 = vsub.s32 0, %v375
    %v377 = vrot.slane %v348, %v376
    %v378 = vlaneseq
    %v379 = vshrl.u32 %v378, 7
    %v380 = vsub.s32 0, %v379
    %v381 = vrot.slane %v362, %v380
    %v382 = vlaneseq
    %v383 = vshrl.u32 %v382, 7
    %v384 = vsub.s32 0, %v383
    %v385 = vrot.slane %v370, %v384
    %v386 = vlaneseq
    %v387 = vshrl.u32 %v386, 7
    %v388 = vsub.s32 0, %v387
    %v389 = vrot.slane %v372, %v388
    %v390 = vlaneseq
    %v391 = vshrl.u32 %v390, 7
    %v392 = vsub.s32 0, %v391
    %v393 = vrot.slane %v355, %v392
    %v394 = vlaneseq
    %v395 = vshrl.u32 %v394, 7
    %v396 = vsub.s32 0, %v395
    %v397 = vrot.slane %v369, %v396
    %v398 = vlaneseq
    %v399 = vshrl.u32 %v398, 7
    %v400 = vsub.s32 0, %v399
    %v401 = vrot.slane %v371, %v400
    %v402 = vlaneseq
    %v403 = vshrl.u32 %v402, 7
    %v404 = vsub.s32 0, %v403
    %v405 = vrot.slane %v373, %v404
    %v414 = vadd.f32 %v286, %v377
    %v415 = vadd.f32 %v291, %v381
    %v416 = vadd.f32 %v296, %v385
    %v417 = vadd.f32 %v301, %v389
    %v418 = vadd.f32 %v306, %v393
    %v419 = vadd.f32 %v311, %v397
    %v420 = vadd.f32 %v316, %v401
    %v421 = vadd.f32 %v321, %v405
    %v422 = vtanh.pop %v414
    %v423 = vtanh.pop %v415
    %v424 = vtanh.pop %v416
    %v425 = vtanh.pop %v417
    %v426 = vtanh.pop %v418
    %v427 = vtanh.pop %v419
    %v428 = vtanh.pop %v420
    %v429 = vtanh.pop %v421
    %v430 = vlaneseq
    %v431 = vshrl.u32 %v430, 7
    %v432 = vsub.s32 0, %v431
    %v433 = vrot.slane %v98, %v432
    %v434 = vmul.f32 %v422, %v433
    %v435 = vmul.f32 %v423, %v433
    %v436 = vmul.f32 %v424, %v433
    %v437 = vmul.f32 %v425, %v433
    %v438 = vmul.f32 %v426, %v433
    %v439 = vmul.f32 %v427, %v433
    %v440 = vmul.f32 %v428, %v433
    %v441 = vmul.f32 %v429, %v433
    %v442 = vsel %vm103, %v434, 0.0
    %443 = vadd.xlane.f32.xlu0 %v442
    %v444 = vpop.xlane.xlu0 %443
    %v445 = vsel %vm103, %v435, 0.0
    %446 = vadd.xlane.f32.xlu0 %v445
    %v447 = vpop.xlane.xlu0 %446
    %v448 = vsel %vm103, %v436, 0.0
    %449 = vadd.xlane.f32.xlu0 %v448
    %v450 = vpop.xlane.xlu0 %449
    %v451 = vsel %vm103, %v437, 0.0
    %452 = vadd.xlane.f32.xlu0 %v451
    %v453 = vpop.xlane.xlu0 %452
    %v454 = vsel %vm103, %v438, 0.0
    %455 = vadd.xlane.f32.xlu0 %v454
    %v456 = vpop.xlane.xlu0 %455
    %v457 = vsel %vm103, %v439, 0.0
    %458 = vadd.xlane.f32.xlu0 %v457
    %v459 = vpop.xlane.xlu0 %458
    %v460 = vsel %vm103, %v440, 0.0
    %461 = vadd.xlane.f32.xlu0 %v460
    %v462 = vpop.xlane.xlu0 %461
    %v463 = vsel %vm103, %v441, 0.0
    %464 = vadd.xlane.f32.xlu0 %v463
    %v465 = vpop.xlane.xlu0 %464
    %v466 = vrot.slane %v444, 4
    %v467 = vmax.f32 %v444, %v466
    %v468 = vrot.slane %v467, 2
    %v469 = vmax.f32 %v467, %v468
    %v470 = vrot.slane %v469, 1
    %v471 = vmax.f32 %v469, %v470
    %v472 = vrot.slane %v447, 4
    %v473 = vmax.f32 %v447, %v472
    %v474 = vrot.slane %v473, 2
    %v475 = vmax.f32 %v473, %v474
    %v476 = vrot.slane %v475, 1
    %v477 = vmax.f32 %v475, %v476
    %v478 = vrot.slane %v450, 4
    %v479 = vmax.f32 %v450, %v478
    %v480 = vrot.slane %v479, 2
    %v481 = vmax.f32 %v479, %v480
    %v482 = vrot.slane %v481, 1
    %v483 = vmax.f32 %v481, %v482
    %v484 = vrot.slane %v453, 4
    %v485 = vmax.f32 %v453, %v484
    %v486 = vrot.slane %v485, 2
    %v487 = vmax.f32 %v485, %v486
    %v488 = vrot.slane %v487, 1
    %v489 = vmax.f32 %v487, %v488
    %v490 = vrot.slane %v456, 4
    %v491 = vmax.f32 %v456, %v490
    %v492 = vrot.slane %v491, 2
    %v493 = vmax.f32 %v491, %v492
    %v494 = vrot.slane %v493, 1
    %v495 = vmax.f32 %v493, %v494
    %v496 = vrot.slane %v459, 4
    %v497 = vmax.f32 %v459, %v496
    %v498 = vrot.slane %v497, 2
    %v499 = vmax.f32 %v497, %v498
    %v500 = vrot.slane %v499, 1
    %v501 = vmax.f32 %v499, %v500
    %v502 = vrot.slane %v462, 4
    %v503 = vmax.f32 %v462, %v502
    %v504 = vrot.slane %v503, 2
    %v505 = vmax.f32 %v503, %v504
    %v506 = vrot.slane %v505, 1
    %v507 = vmax.f32 %v505, %v506
    %v508 = vrot.slane %v465, 4
    %v509 = vmax.f32 %v465, %v508
    %v510 = vrot.slane %v509, 2
    %v511 = vmax.f32 %v509, %v510
    %v512 = vrot.slane %v511, 1
    %v513 = vmax.f32 %v511, %v512
    %v514 = vsub.f32 %v444, %v471
    %v515 = vsub.f32 %v447, %v477
    %v516 = vsub.f32 %v450, %v483
    %v517 = vsub.f32 %v453, %v489
    %v518 = vsub.f32 %v456, %v495
    %v519 = vsub.f32 %v459, %v501
    %v520 = vsub.f32 %v462, %v507
    %v521 = vsub.f32 %v465, %v513
    %v522 = vmul.f32 %v514, 1.442695
    %v523 = vpow.pop %v522
    %v524 = vmul.f32 %v515, 1.442695
    %v525 = vpow.pop %v524
    %v526 = vmul.f32 %v516, 1.442695
    %v527 = vpow.pop %v526
    %v528 = vmul.f32 %v517, 1.442695
    %v529 = vpow.pop %v528
    %v530 = vmul.f32 %v518, 1.442695
    %v531 = vpow.pop %v530
    %v532 = vmul.f32 %v519, 1.442695
    %v533 = vpow.pop %v532
    %v534 = vmul.f32 %v520, 1.442695
    %v535 = vpow.pop %v534
    %v536 = vmul.f32 %v521, 1.442695
    %v537 = vpow.pop %v536
    %v538 = vrot.slane %v523, 4
    %v539 = vadd.f32 %v523, %v538
    %v540 = vrot.slane %v539, 2
    %v541 = vadd.f32 %v539, %v540
    %v542 = vrot.slane %v541, 1
    %v543 = vadd.f32 %v541, %v542
    %v544 = vrot.slane %v525, 4
    %v545 = vadd.f32 %v525, %v544
    %v546 = vrot.slane %v545, 2
    %v547 = vadd.f32 %v545, %v546
    %v548 = vrot.slane %v547, 1
    %v549 = vadd.f32 %v547, %v548
    %v550 = vrot.slane %v527, 4
    %v551 = vadd.f32 %v527, %v550
    %v552 = vrot.slane %v551, 2
    %v553 = vadd.f32 %v551, %v552
    %v554 = vrot.slane %v553, 1
    %v555 = vadd.f32 %v553, %v554
    %v556 = vrot.slane %v529, 4
    %v557 = vadd.f32 %v529, %v556
    %v558 = vrot.slane %v557, 2
    %v559 = vadd.f32 %v557, %v558
    %v560 = vrot.slane %v559, 1
    %v561 = vadd.f32 %v559, %v560
    %v562 = vrot.slane %v531, 4
    %v563 = vadd.f32 %v531, %v562
    %v564 = vrot.slane %v563, 2
    %v565 = vadd.f32 %v563, %v564
    %v566 = vrot.slane %v565, 1
    %v567 = vadd.f32 %v565, %v566
    %v568 = vrot.slane %v533, 4
    %v569 = vadd.f32 %v533, %v568
    %v570 = vrot.slane %v569, 2
    %v571 = vadd.f32 %v569, %v570
    %v572 = vrot.slane %v571, 1
    %v573 = vadd.f32 %v571, %v572
    %v574 = vrot.slane %v535, 4
    %v575 = vadd.f32 %v535, %v574
    %v576 = vrot.slane %v575, 2
    %v577 = vadd.f32 %v575, %v576
    %v578 = vrot.slane %v577, 1
    %v579 = vadd.f32 %v577, %v578
    %v580 = vrot.slane %v537, 4
    %v581 = vadd.f32 %v537, %v580
    %v582 = vrot.slane %v581, 2
    %v583 = vadd.f32 %v581, %v582
    %v584 = vrot.slane %v583, 1
    %v585 = vadd.f32 %v583, %v584
    %v586 = vrcp.pop %v543
    %v587 = vmul.f32 %v523, %v586
    %v588 = vrcp.pop %v549
    %v589 = vmul.f32 %v525, %v588
    %v590 = vrcp.pop %v555
    %v591 = vmul.f32 %v527, %v590
    %v592 = vrcp.pop %v561
    %v593 = vmul.f32 %v529, %v592
    %v594 = vrcp.pop %v567
    %v595 = vmul.f32 %v531, %v594
    %v596 = vrcp.pop %v573
    %v597 = vmul.f32 %v533, %v596
    %v598 = vrcp.pop %v579
    %v599 = vmul.f32 %v535, %v598
    %v600 = vrcp.pop %v585
    %v601 = vmul.f32 %v537, %v600
    %v602 = vmul.f32 %v587, %v89
    %v603 = vmul.f32 %v589, %v90
    %v604 = vmul.f32 %v591, %v91
    %v605 = vmul.f32 %v593, %v92
    %v606 = vmul.f32 %v595, %v93
    %v607 = vmul.f32 %v597, %v94
    %v608 = vmul.f32 %v599, %v95
    %v609 = vmul.f32 %v601, %v96
    %v610 = vsel %vm103, %v602, 0.0
    %v611 = vrot.slane %v610, 4
    %v612 = vadd.f32 %v610, %v611
    %v613 = vrot.slane %v612, 2
    %v614 = vadd.f32 %v612, %v613
    %v615 = vrot.slane %v614, 1
    %v616 = vadd.f32 %v614, %v615
    %v617 = vsel %vm103, %v603, 0.0
    %v618 = vrot.slane %v617, 4
    %v619 = vadd.f32 %v617, %v618
    %v620 = vrot.slane %v619, 2
    %v621 = vadd.f32 %v619, %v620
    %v622 = vrot.slane %v621, 1
    %v623 = vadd.f32 %v621, %v622
    %v624 = vsel %vm103, %v604, 0.0
    %v625 = vrot.slane %v624, 4
    %v626 = vadd.f32 %v624, %v625
    %v627 = vrot.slane %v626, 2
    %v628 = vadd.f32 %v626, %v627
    %v629 = vrot.slane %v628, 1
    %v630 = vadd.f32 %v628, %v629
    %v631 = vsel %vm103, %v605, 0.0
    %v632 = vrot.slane %v631, 4
    %v633 = vadd.f32 %v631, %v632
    %v634 = vrot.slane %v633, 2
    %v635 = vadd.f32 %v633, %v634
    %v636 = vrot.slane %v635, 1
    %v637 = vadd.f32 %v635, %v636
    %v638 = vsel %vm103, %v606, 0.0
    %v639 = vrot.slane %v638, 4
    %v640 = vadd.f32 %v638, %v639
    %v641 = vrot.slane %v640, 2
    %v642 = vadd.f32 %v640, %v641
    %v643 = vrot.slane %v642, 1
    %v644 = vadd.f32 %v642, %v643
    %v645 = vsel %vm103, %v607, 0.0
    %v646 = vrot.slane %v645, 4
    %v647 = vadd.f32 %v645, %v646
    %v648 = vrot.slane %v647, 2
    %v649 = vadd.f32 %v647, %v648
    %v650 = vrot.slane %v649, 1
    %v651 = vadd.f32 %v649, %v650
    %v652 = vsel %vm103, %v608, 0.0
    %v653 = vrot.slane %v652, 4
    %v654 = vadd.f32 %v652, %v653
    %v655 = vrot.slane %v654, 2
    %v656 = vadd.f32 %v654, %v655
    %v657 = vrot.slane %v656, 1
    %v658 = vadd.f32 %v656, %v657
    %v659 = vsel %vm103, %v609, 0.0
    %v660 = vrot.slane %v659, 4
    %v661 = vadd.f32 %v659, %v660
    %v662 = vrot.slane %v661, 2
    %v663 = vadd.f32 %v661, %v662
    %v664 = vrot.slane %v663, 1
    %v665 = vadd.f32 %v663, %v664
    %v666 = vld [vmem:[%s0] sm:$0xff]
    %vm675 = vcmask 1041409
    %v676 = vsel %vm675, %v623, %v616
    %vm677 = vcmask 1042434
    %v678 = vsel %vm677, %v630, %v676
    %vm679 = vcmask 1043459
    %v680 = vsel %vm679, %v637, %v678
    %vm681 = vcmask 1044484
    %v682 = vsel %vm681, %v644, %v680
    %vm683 = vcmask 1045509
    %v684 = vsel %vm683, %v651, %v682
    %vm685 = vcmask 1046534
    %v686 = vsel %vm685, %v658, %v684
    %vm687 = vcmask 1047559
    %v688 = vsel %vm687, %v665, %v686
    %689 = vrot.lane.b32.xlu0 %v688, 32
    %v690 = vpop.permute.xlu0 %689
    %693 = vrot.lane.b32.xlu0 %v86, 64
    %v694 = vpop.permute.xlu0 %693
    %v696 = vsel %vm103, %v666, %v690
    %v697 = vsel %vm117, %v696, %v694
    %v698 = vld [vmem:[%s4] sm:$0xff]
    %v699 = vld [vmem:[%s4 + $0x8] sm:$0xff]
    %v700 = vld [vmem:[%s4 + $0x10] sm:$0xff]
    %v701 = vld [vmem:[%s4 + $0x18] sm:$0xff]
    %v702 = vld [vmem:[%s4 + $0x20] sm:$0xff]
    %v703 = vld [vmem:[%s4 + $0x28] sm:$0xff]
    %v704 = vld [vmem:[%s4 + $0x30] sm:$0xff]
    %v705 = vld [vmem:[%s4 + $0x38] sm:$0xff]
    %v706 = vld [vmem:[%s4 + $0x40] sm:$0xff]
    %v707 = vld [vmem:[%s4 + $0x48] sm:$0xff]
    %v708 = vld [vmem:[%s4 + $0x50] sm:$0xff]
    %v709 = vld [vmem:[%s4 + $0x58] sm:$0xff]
    %v710 = vld [vmem:[#allocation7 + $0x2] sm:$0x1]
    %v711 = vlaneseq
    %v712 = vshrl.u32 %v711, 7
    %v713 = vsub.s32 0, %v712
    %v714 = vrot.slane %v710, %v713
    %vm715 = vcmask 785408
    %v717 = vsel %vm715, %v697, 0
    %719 = vmatprep.subr.mxu0 0.0
    %720 = vmatpush1.msra.mxu0 %v698
    %721 = vmatprep.subr.mxu0 0.0
    %722 = vmatpush1.msra.mxu0 %v699
    %723 = vmatprep.subr.mxu0 0.0
    %724 = vmatpush1.msra.mxu0 %v700
    %725 = vmatprep.subr.mxu0 0.0
    %726 = vmatpush1.msra.mxu0 %v701
    %727 = vmatprep.subr.mxu0 0.0
    %728 = vmatpush1.msra.mxu0 %v702
    %729 = vmatprep.subr.mxu0 0.0
    %730 = vmatpush1.msra.mxu0 %v703
    %731 = vmatprep.subr.mxu0 0.0
    %732 = vmatpush1.msra.mxu0 %v704
    %733 = vmatprep.subr.mxu0 0.0
    %734 = vmatpush1.msra.mxu0 %v705
    %735 = vmatprep.subr.mxu0 0.0
    %736 = vmatpush1.msra.mxu0 %v706
    %737 = vmatprep.subr.mxu0 0.0
    %738 = vmatpush1.msra.mxu0 %v707
    %739 = vmatprep.subr.mxu0 0.0
    %740 = vmatpush1.msra.mxu0 %v708
    %741 = vmatprep.subr.mxu0 0.0
    %742 = vmatpush1.msra.mxu0 %v709
    %743 = vmatprep.subr.mxu0 0.0
    %744 = vmatpush1.msra.mxu0 0.0
    %745 = vmatprep.subr.mxu0 0.0
    %746 = vmatpush1.msra.mxu0 0.0
    %747 = vmatprep.subr.mxu0 0.0
    %748 = vmatpush1.msra.mxu0 0.0
    %749 = vmatprep.subr.mxu0 0.0
    %750 = vmatpush1.msra.mxu0 0.0
    %751 = vmatprep.subr.mxu0 0.0
    %752 = vmatpush1.msra.mxu0 0.0
    %753 = vmatprep.subr.mxu0 0.0
    %754 = vmatpush1.msra.mxu0 0.0
    %755 = vmatprep.subr.mxu0 0.0
    %756 = vmatpush1.msra.mxu0 0.0
    %757 = vmatprep.subr.mxu0 0.0
    %758 = vmatpush1.msra.mxu0 0.0
    %759 = vmatprep.subr.mxu0 0.0
    %760 = vmatpush1.msra.mxu0 0.0
    %761 = vmatprep.subr.mxu0 0.0
    %762 = vmatpush1.msra.mxu0 0.0
    %763 = vmatprep.subr.mxu0 0.0
    %764 = vmatpush1.msra.mxu0 0.0
    %765 = vmatprep.subr.mxu0 0.0
    %766 = vmatpush1.msra.mxu0 0.0
    %767 = vmatprep.subr.mxu0 0.0
    %768 = vmatpush1.msra.mxu0 0.0
    %769 = vmatprep.subr.mxu0 0.0
    %770 = vmatpush1.msra.mxu0 0.0
    %771 = vmatprep.subr.mxu0 0.0
    %772 = vmatpush1.msra.mxu0 0.0
    %773 = vmatprep.subr.mxu0 0.0
    %774 = vmatpush1.msra.mxu0 0.0
    %775 = vmatprep.subr.mxu0 0.0
    %776 = vmatpush1.msra.mxu0 0.0
    %777 = vmatprep.subr.mxu0 0.0
    %778 = vmatpush1.msra.mxu0 0.0
    %779 = vmatprep.subr.mxu0 0.0
    %780 = vmatpush1.msra.mxu0 0.0
    %781 = vmatprep.subr.mxu0 0.0
    %782 = vmatpush1.msra.mxu0 0.0
    %783 = vmatprep.mubr.f32.mxu0 0.0
    %784 = vmatmul.mubr.f32.gmra.mrb[0].mxu0 %v717
    %v785 = vpop.f32.mrb[0].mxu0
    %v786 = vadd.f32 %v714, %v785
    %v787 = vpop.f32.mrb[0].mxu0
    %788 = vdwg.mxu0
    %v789 = vxor.u32 %v786, 2147483648
    %v790 = vmul.f32 %v789, 1.442695
    %v791 = vpow.pop %v790
    %v792 = vadd.f32 %v791, 1.0
    %v793 = vrcp.pop %v792
    %v794 = vmul.f32 1.0, %v793
    %v795 = vtanh.pop %v786
    %v796 = vmul.f32 %v794, %v101
    %798 = vrot.lane.b32.xlu0 %v795, 64
    %v799 = vpop.permute.xlu0 %798
    %v801 = vmul.f32 %v794, %v799
    %803 = vrot.lane.b32.xlu0 %v801, 32
    %v804 = vpop.permute.xlu0 %803
    %v806 = vadd.f32 %v796, %v804
    %v807 = vtanh.pop %v806
    %809 = vrot.lane.b32.xlu0 %v807, 64
    %v810 = vpop.permute.xlu0 %809
    %v812 = vmul.f32 %v794, %v810
    %814 = vrot.lane.b32.xlu0 %v812, 32
    %v815 = vpop.permute.xlu0 %814
    %817 = vst.msk [vmem:[#allocation11] sm:$0xff] %vm103, %v815
    %819 = vrot.lane.b32.xlu0 %v806, 96
    %v820 = vpop.permute.xlu0 %819
    %s822 = scalar_lea.vmem [#allocation11], 24
    %823 = vst.msk [vmem:[%s822] sm:$0xff] %vm103, %v820
    %s824 = scalar_lea.vmem [#allocation2], 8
    %v825 = vld [vmem:[%s824] sm:$0xff]
    %s826 = scalar_lea.vmem [#allocation2], 32
    %v827 = vld [vmem:[%s826] sm:$0xff]
    %829 = vrot.lane.b32.xlu0 %v825, 32
    %v830 = vpop.permute.xlu0 %829
    %v832 = vsel %vm103, %v815, %v830
    %v833 = vld [vmem:[%s5] sm:$0xff]
    %v834 = vld [vmem:[%s5 + $0x8] sm:$0xff]
    %v835 = vld [vmem:[%s5 + $0x10] sm:$0xff]
    %v836 = vld [vmem:[%s5 + $0x18] sm:$0xff]
    %v837 = vld [vmem:[%s5 + $0x20] sm:$0xff]
    %v838 = vld [vmem:[%s5 + $0x28] sm:$0xff]
    %v839 = vld [vmem:[%s5 + $0x30] sm:$0xff]
    %v840 = vld [vmem:[%s5 + $0x38] sm:$0xff]
    %v841 = vld [vmem:[#allocation7 + $0x3] sm:$0x1]
    %v842 = vlaneseq
    %v843 = vshrl.u32 %v842, 7
    %v844 = vsub.s32 0, %v843
    %v845 = vrot.slane %v841, %v844
    %v847 = vsel %vm117, %v832, 0
    %849 = vmatprep.subr.mxu0 0.0
    %850 = vmatpush1.msra.mxu0 %v833
    %851 = vmatprep.subr.mxu0 0.0
    %852 = vmatpush1.msra.mxu0 %v834
    %853 = vmatprep.subr.mxu0 0.0
    %854 = vmatpush1.msra.mxu0 %v835
    %855 = vmatprep.subr.mxu0 0.0
    %856 = vmatpush1.msra.mxu0 %v836
    %857 = vmatprep.subr.mxu0 0.0
    %858 = vmatpush1.msra.mxu0 %v837
    %859 = vmatprep.subr.mxu0 0.0
    %860 = vmatpush1.msra.mxu0 %v838
    %861 = vmatprep.subr.mxu0 0.0
    %862 = vmatpush1.msra.mxu0 %v839
    %863 = vmatprep.subr.mxu0 0.0
    %864 = vmatpush1.msra.mxu0 %v840
    %865 = vmatprep.subr.mxu0 0.0
    %866 = vmatpush1.msra.mxu0 0.0
    %867 = vmatprep.subr.mxu0 0.0
    %868 = vmatpush1.msra.mxu0 0.0
    %869 = vmatprep.subr.mxu0 0.0
    %870 = vmatpush1.msra.mxu0 0.0
    %871 = vmatprep.subr.mxu0 0.0
    %872 = vmatpush1.msra.mxu0 0.0
    %873 = vmatprep.subr.mxu0 0.0
    %874 = vmatpush1.msra.mxu0 0.0
    %875 = vmatprep.subr.mxu0 0.0
    %876 = vmatpush1.msra.mxu0 0.0
    %877 = vmatprep.subr.mxu0 0.0
    %878 = vmatpush1.msra.mxu0 0.0
    %879 = vmatprep.subr.mxu0 0.0
    %880 = vmatpush1.msra.mxu0 0.0
    %881 = vmatprep.subr.mxu0 0.0
    %882 = vmatpush1.msra.mxu0 0.0
    %883 = vmatprep.subr.mxu0 0.0
    %884 = vmatpush1.msra.mxu0 0.0
    %885 = vmatprep.subr.mxu0 0.0
    %886 = vmatpush1.msra.mxu0 0.0
    %887 = vmatprep.subr.mxu0 0.0
    %888 = vmatpush1.msra.mxu0 0.0
    %889 = vmatprep.subr.mxu0 0.0
    %890 = vmatpush1.msra.mxu0 0.0
    %891 = vmatprep.subr.mxu0 0.0
    %892 = vmatpush1.msra.mxu0 0.0
    %893 = vmatprep.subr.mxu0 0.0
    %894 = vmatpush1.msra.mxu0 0.0
    %895 = vmatprep.subr.mxu0 0.0
    %896 = vmatpush1.msra.mxu0 0.0
    %897 = vmatprep.subr.mxu0 0.0
    %898 = vmatpush1.msra.mxu0 0.0
    %899 = vmatprep.subr.mxu0 0.0
    %900 = vmatpush1.msra.mxu0 0.0
    %901 = vmatprep.subr.mxu0 0.0
    %902 = vmatpush1.msra.mxu0 0.0
    %903 = vmatprep.subr.mxu0 0.0
    %904 = vmatpush1.msra.mxu0 0.0
    %905 = vmatprep.subr.mxu0 0.0
    %906 = vmatpush1.msra.mxu0 0.0
    %907 = vmatprep.subr.mxu0 0.0
    %908 = vmatpush1.msra.mxu0 0.0
    %909 = vmatprep.subr.mxu0 0.0
    %910 = vmatpush1.msra.mxu0 0.0
    %911 = vmatprep.subr.mxu0 0.0
    %912 = vmatpush1.msra.mxu0 0.0
    %913 = vmatprep.mubr.f32.mxu0 0.0
    %914 = vmatmul.mubr.f32.gmra.mrb[0].mxu0 %v847
    %v915 = vpop.f32.mrb[0].mxu0
    %v916 = vadd.f32 %v845, %v915
    %v917 = vpop.f32.mrb[0].mxu0
    %918 = vdwg.mxu0
    %v919 = vxor.u32 %v916, 2147483648
    %v920 = vmul.f32 %v919, 1.442695
    %v921 = vpow.pop %v920
    %v922 = vadd.f32 %v921, 1.0
    %v923 = vrcp.pop %v922
    %v924 = vmul.f32 1.0, %v923
    %v925 = vtanh.pop %v916
    %927 = vrot.lane.b32.xlu0 %v827, 32
    %v928 = vpop.permute.xlu0 %927
    %v930 = vmul.f32 %v924, %v928
    %932 = vrot.lane.b32.xlu0 %v925, 64
    %v933 = vpop.permute.xlu0 %932
    %v935 = vmul.f32 %v924, %v933
    %937 = vrot.lane.b32.xlu0 %v935, 32
    %v938 = vpop.permute.xlu0 %937
    %v940 = vadd.f32 %v930, %v938
    %v941 = vtanh.pop %v940
    %943 = vrot.lane.b32.xlu0 %v941, 64
    %v944 = vpop.permute.xlu0 %943
    %v946 = vmul.f32 %v924, %v944
    %948 = vrot.lane.b32.xlu0 %v946, 32
    %v949 = vpop.permute.xlu0 %948
    %s951 = scalar_lea.vmem [#allocation11], 8
    %952 = vst.msk [vmem:[%s951] sm:$0xff] %vm103, %v949
    %954 = vrot.lane.b32.xlu0 %v940, 96
    %v955 = vpop.permute.xlu0 %954
    %s957 = scalar_lea.vmem [#allocation11], 32
    %958 = vst.msk [vmem:[%s957] sm:$0xff] %vm103, %v955
    %s959 = scalar_lea.vmem [#allocation2], 16
    %v960 = vld [vmem:[%s959] sm:$0xff]
    %s961 = scalar_lea.vmem [#allocation2], 40
    %v962 = vld [vmem:[%s961] sm:$0xff]
    %964 = vrot.lane.b32.xlu0 %v960, 32
    %v965 = vpop.permute.xlu0 %964
    %v967 = vsel %vm103, %v949, %v965
    %s968 = scalar_lea.vmem %s5, 64
    %v969 = vld [vmem:[%s968] sm:$0xff]
    %v970 = vld [vmem:[%s968 + $0x8] sm:$0xff]
    %v971 = vld [vmem:[%s968 + $0x10] sm:$0xff]
    %v972 = vld [vmem:[%s968 + $0x18] sm:$0xff]
    %v973 = vld [vmem:[%s968 + $0x20] sm:$0xff]
    %v974 = vld [vmem:[%s968 + $0x28] sm:$0xff]
    %v975 = vld [vmem:[%s968 + $0x30] sm:$0xff]
    %v976 = vld [vmem:[%s968 + $0x38] sm:$0xff]
    %v977 = vld [vmem:[#allocation7 + $0x4] sm:$0x1]
    %v978 = vlaneseq
    %v979 = vshrl.u32 %v978, 7
    %v980 = vsub.s32 0, %v979
    %v981 = vrot.slane %v977, %v980
    %v983 = vsel %vm117, %v967, 0
    %985 = vmatprep.subr.mxu0 0.0
    %986 = vmatpush1.msra.mxu0 %v969
    %987 = vmatprep.subr.mxu0 0.0
    %988 = vmatpush1.msra.mxu0 %v970
    %989 = vmatprep.subr.mxu0 0.0
    %990 = vmatpush1.msra.mxu0 %v971
    %991 = vmatprep.subr.mxu0 0.0
    %992 = vmatpush1.msra.mxu0 %v972
    %993 = vmatprep.subr.mxu0 0.0
    %994 = vmatpush1.msra.mxu0 %v973
    %995 = vmatprep.subr.mxu0 0.0
    %996 = vmatpush1.msra.mxu0 %v974
    %997 = vmatprep.subr.mxu0 0.0
    %998 = vmatpush1.msra.mxu0 %v975
    %999 = vmatprep.subr.mxu0 0.0
    %1000 = vmatpush1.msra.mxu0 %v976
    %1001 = vmatprep.subr.mxu0 0.0
    %1002 = vmatpush1.msra.mxu0 0.0
    %1003 = vmatprep.subr.mxu0 0.0
    %1004 = vmatpush1.msra.mxu0 0.0
    %1005 = vmatprep.subr.mxu0 0.0
    %1006 = vmatpush1.msra.mxu0 0.0
    %1007 = vmatprep.subr.mxu0 0.0
    %1008 = vmatpush1.msra.mxu0 0.0
    %1009 = vmatprep.subr.mxu0 0.0
    %1010 = vmatpush1.msra.mxu0 0.0
    %1011 = vmatprep.subr.mxu0 0.0
    %1012 = vmatpush1.msra.mxu0 0.0
    %1013 = vmatprep.subr.mxu0 0.0
    %1014 = vmatpush1.msra.mxu0 0.0
    %1015 = vmatprep.subr.mxu0 0.0
    %1016 = vmatpush1.msra.mxu0 0.0
    %1017 = vmatprep.subr.mxu0 0.0
    %1018 = vmatpush1.msra.mxu0 0.0
    %1019 = vmatprep.subr.mxu0 0.0
    %1020 = vmatpush1.msra.mxu0 0.0
    %1021 = vmatprep.subr.mxu0 0.0
    %1022 = vmatpush1.msra.mxu0 0.0
    %1023 = vmatprep.subr.mxu0 0.0
    %1024 = vmatpush1.msra.mxu0 0.0
    %1025 = vmatprep.subr.mxu0 0.0
    %1026 = vmatpush1.msra.mxu0 0.0
    %1027 = vmatprep.subr.mxu0 0.0
    %1028 = vmatpush1.msra.mxu0 0.0
    %1029 = vmatprep.subr.mxu0 0.0
    %1030 = vmatpush1.msra.mxu0 0.0
    %1031 = vmatprep.subr.mxu0 0.0
    %1032 = vmatpush1.msra.mxu0 0.0
    %1033 = vmatprep.subr.mxu0 0.0
    %1034 = vmatpush1.msra.mxu0 0.0
    %1035 = vmatprep.subr.mxu0 0.0
    %1036 = vmatpush1.msra.mxu0 0.0
    %1037 = vmatprep.subr.mxu0 0.0
    %1038 = vmatpush1.msra.mxu0 0.0
    %1039 = vmatprep.subr.mxu0 0.0
    %1040 = vmatpush1.msra.mxu0 0.0
    %1041 = vmatprep.subr.mxu0 0.0
    %1042 = vmatpush1.msra.mxu0 0.0
    %1043 = vmatprep.subr.mxu0 0.0
    %1044 = vmatpush1.msra.mxu0 0.0
    %1045 = vmatprep.subr.mxu0 0.0
    %1046 = vmatpush1.msra.mxu0 0.0
    %1047 = vmatprep.subr.mxu0 0.0
    %1048 = vmatpush1.msra.mxu0 0.0
    %1049 = vmatprep.mubr.f32.mxu0 0.0
    %1050 = vmatmul.mubr.f32.gmra.mrb[0].mxu0 %v983
    %v1051 = vpop.f32.mrb[0].mxu0
    %v1052 = vadd.f32 %v981, %v1051
    %v1053 = vpop.f32.mrb[0].mxu0
    %1054 = vdwg.mxu0
    %v1055 = vxor.u32 %v1052, 2147483648
    %v1056 = vmul.f32 %v1055, 1.442695
    %v1057 = vpow.pop %v1056
    %v1058 = vadd.f32 %v1057, 1.0
    %v1059 = vrcp.pop %v1058
    %v1060 = vmul.f32 1.0, %v1059
    %v1061 = vtanh.pop %v1052
    %1063 = vrot.lane.b32.xlu0 %v962, 32
    %v1064 = vpop.permute.xlu0 %1063
    %v1066 = vmul.f32 %v1060, %v1064
    %1068 = vrot.lane.b32.xlu0 %v1061, 64
    %v1069 = vpop.permute.xlu0 %1068
    %v1071 = vmul.f32 %v1060, %v1069
    %1073 = vrot.lane.b32.xlu0 %v1071, 32
    %v1074 = vpop.permute.xlu0 %1073
    %v1076 = vadd.f32 %v1066, %v1074
    %v1077 = vtanh.pop %v1076
    %1079 = vrot.lane.b32.xlu0 %v1077, 64
    %v1080 = vpop.permute.xlu0 %1079
    %v1082 = vmul.f32 %v1060, %v1080
    %1084 = vrot.lane.b32.xlu0 %v1082, 32
    %v1085 = vpop.permute.xlu0 %1084
    %s1087 = scalar_lea.vmem [#allocation11], 16
    %1088 = vst.msk [vmem:[%s1087] sm:$0xff] %vm103, %v1085
    %1090 = vrot.lane.b32.xlu0 %v1076, 96
    %v1091 = vpop.permute.xlu0 %1090
    %s1093 = scalar_lea.vmem [#allocation11], 40
    %1094 = vst.msk [vmem:[%s1093] sm:$0xff] %vm103, %v1091
    %v1095 = vld [vmem:[#allocation8] sm:$0xff]
    %v1096 = vld [vmem:[#allocation8 + $0x8] sm:$0xff]
    %v1097 = vld [vmem:[#allocation8 + $0x10] sm:$0xff]
    %v1098 = vld [vmem:[#allocation8 + $0x18] sm:$0xff]
    %v1099 = vld [vmem:[#allocation7 + $0x5] sm:$0x1]
    %v1100 = vlaneseq
    %v1101 = vshrl.u32 %v1100, 7
    %v1102 = vsub.s32 0, %v1101
    %v1103 = vrot.slane %v1099, %v1102
    %v1104 = vsel %vm103, %v1085, 0
    %1106 = vmatprep.subr.mxu0 0.0
    %1107 = vmatpush1.msra.mxu0 %v1095
    %1108 = vmatprep.subr.mxu0 0.0
    %1109 = vmatpush1.msra.mxu0 %v1096
    %1110 = vmatprep.subr.mxu0 0.0
    %1111 = vmatpush1.msra.mxu0 %v1097
    %1112 = vmatprep.subr.mxu0 0.0
    %1113 = vmatpush1.msra.mxu0 %v1098
    %1114 = vmatprep.subr.mxu0 0.0
    %1115 = vmatpush1.msra.mxu0 0.0
    %1116 = vmatprep.subr.mxu0 0.0
    %1117 = vmatpush1.msra.mxu0 0.0
    %1118 = vmatprep.subr.mxu0 0.0
    %1119 = vmatpush1.msra.mxu0 0.0
    %1120 = vmatprep.subr.mxu0 0.0
    %1121 = vmatpush1.msra.mxu0 0.0
    %1122 = vmatprep.subr.mxu0 0.0
    %1123 = vmatpush1.msra.mxu0 0.0
    %1124 = vmatprep.subr.mxu0 0.0
    %1125 = vmatpush1.msra.mxu0 0.0
    %1126 = vmatprep.subr.mxu0 0.0
    %1127 = vmatpush1.msra.mxu0 0.0
    %1128 = vmatprep.subr.mxu0 0.0
    %1129 = vmatpush1.msra.mxu0 0.0
    %1130 = vmatprep.subr.mxu0 0.0
    %1131 = vmatpush1.msra.mxu0 0.0
    %1132 = vmatprep.subr.mxu0 0.0
    %1133 = vmatpush1.msra.mxu0 0.0
    %1134 = vmatprep.subr.mxu0 0.0
    %1135 = vmatpush1.msra.mxu0 0.0
    %1136 = vmatprep.subr.mxu0 0.0
    %1137 = vmatpush1.msra.mxu0 0.0
    %1138 = vmatprep.subr.mxu0 0.0
    %1139 = vmatpush1.msra.mxu0 0.0
    %1140 = vmatprep.subr.mxu0 0.0
    %1141 = vmatpush1.msra.mxu0 0.0
    %1142 = vmatprep.subr.mxu0 0.0
    %1143 = vmatpush1.msra.mxu0 0.0
    %1144 = vmatprep.subr.mxu0 0.0
    %1145 = vmatpush1.msra.mxu0 0.0
    %1146 = vmatprep.subr.mxu0 0.0
    %1147 = vmatpush1.msra.mxu0 0.0
    %1148 = vmatprep.subr.mxu0 0.0
    %1149 = vmatpush1.msra.mxu0 0.0
    %1150 = vmatprep.subr.mxu0 0.0
    %1151 = vmatpush1.msra.mxu0 0.0
    %1152 = vmatprep.subr.mxu0 0.0
    %1153 = vmatpush1.msra.mxu0 0.0
    %1154 = vmatprep.subr.mxu0 0.0
    %1155 = vmatpush1.msra.mxu0 0.0
    %1156 = vmatprep.subr.mxu0 0.0
    %1157 = vmatpush1.msra.mxu0 0.0
    %1158 = vmatprep.subr.mxu0 0.0
    %1159 = vmatpush1.msra.mxu0 0.0
    %1160 = vmatprep.subr.mxu0 0.0
    %1161 = vmatpush1.msra.mxu0 0.0
    %1162 = vmatprep.subr.mxu0 0.0
    %1163 = vmatpush1.msra.mxu0 0.0
    %1164 = vmatprep.subr.mxu0 0.0
    %1165 = vmatpush1.msra.mxu0 0.0
    %1166 = vmatprep.subr.mxu0 0.0
    %1167 = vmatpush1.msra.mxu0 0.0
    %1168 = vmatprep.subr.mxu0 0.0
    %1169 = vmatpush1.msra.mxu0 0.0
    %1170 = vmatprep.mubr.f32.mxu0 0.0
    %1171 = vmatmul.mubr.f32.gmra.mrb[0].mxu0 %v1104
    %v1172 = vpop.f32.mrb[0].mxu0
    %v1173 = vadd.f32 %v1103, %v1172
    %v1174 = vpop.f32.mrb[0].mxu0
    %1175 = vdwg.mxu0
    %1176 = vmax.xlane.f32.xlu0 %v1173
    %v1177 = vpop.xlane.xlu0 %1176
    %v1178 = vsub.f32 %v1173, %v1177
    %v1179 = vmul.f32 %v1178, 1.442695
    %v1180 = vpow.pop %v1179
    %1181 = vadd.xlane.f32.xlu0 %v1180
    %v1182 = vpop.xlane.xlu0 %1181
    %v1183 = vlog2.pop %v1182
    %v1184 = vmul.f32 %v1183, 0.6931472
    %v1185 = vsub.f32 %v1178, %v1184
    %1186 = vst [vmem:[#allocation10] sm:$0xff] %v1185
    // Predicated region
    $region50: #{tpu_custom_call.1} parent=1 // pred_check
      _
    $region51: #{tpu_custom_call.1} parent=1 // pred_check_branch
      %1188 = sbr.rel (0) target = $region53
    $region52: #{tpu_custom_call.1} parent=1 // pred_region
      %s1190 = ssub.s32 128, 128
      %1191 = vsyncadd [#allocation4], %s1190
      %s1193 = sshll.u32 [#allocation10], 4
      %s1194 = int_to_ptr.vmem [resolvable:$true] %s1193
      %1196 = dma.vmem_to_hbm [thread:$0]  %s1194, 128, %s8, [#allocation4]
    $region53: #{tpu_custom_call.1} parent=1 // pred_fallthru
      _
    // Predicated region
    $region54: #{tpu_custom_call.1} parent=1 // pred_check
      _
    $region55: #{tpu_custom_call.1} parent=1 // pred_check_branch
      %1198 = sbr.rel (0) target = $region57
    $region56: #{tpu_custom_call.1} parent=1 // pred_region
      %s1200 = ssub.s32 768, 768
      %1201 = vsyncadd [#allocation12], %s1200
      %s1202 = sshll.u32 [#allocation11], 4
      %s1203 = int_to_ptr.vmem [resolvable:$true] %s1202
      %1208 = dma.vmem_to_hbm [thread:$0]  %s1203, 768, %s9, [#allocation12], 128, 128, 8
    $region57: #{tpu_custom_call.1} parent=1 // pred_fallthru
      _
    // Predicated region
    $region58: #{tpu_custom_call.1} parent=1 // pred_check
      _
    $region59: #{tpu_custom_call.1} parent=1 // pred_check_branch
      %1210 = sbr.rel (0) target = $region61
    $region60: #{tpu_custom_call.1} parent=1 // pred_region
      %1211 = dma.done [#allocation4], 128
    $region61: #{tpu_custom_call.1} parent=1 // pred_fallthru
      _
    // Predicated region
    $region62: #{tpu_custom_call.1} parent=1 // pred_check
      _
    $region63: #{tpu_custom_call.1} parent=1 // pred_check_branch
      %1213 = sbr.rel (0) target = $region65
    $region64: #{tpu_custom_call.1} parent=1 // pred_region
      %1214 = dma.done [#allocation12], 768
    $region65: #{tpu_custom_call.1} parent=1 // pred_fallthru
      _
    %1215 = vsyncpa [#allocation3], 1
    %1216 = vsyncpa [#allocation6], 1
    %1217 = vsyncpa [#allocation9], 1
    %1218 = vsyncpa [#allocation4], 1
    %1219 = vsyncpa [#allocation12], 1

</llo_original>
